<compile_context>
chip_gen: v7x
topology: tpu7x:2x2x1
jax: 0.10.0
libtpu: 0.0.40
codegen_flags: <defaults>
</compile_context>

<pallas_src>
import functools

import jax
import jax.numpy as jnp
from jax.experimental import pallas as pl
from jax.experimental.pallas import tpu as pltpu


def _round_up(x, m):
    return -(-x // m) * m


def _additive_attention_kernel(
    q_ref,    # (TB, dim_q)          stream dtype
    k_ref,    # (TB, NKP, dim_k)     stream dtype
    v_ref,    # (TB, NKP, dim_v)     stream dtype
    wkT_ref,  # (dim_k, hid)         stream dtype (pre-transposed on host)
    wqT_ref,  # (dim_q, hid)         stream dtype (pre-transposed on host)
    bqk_ref,  # (1, hid) f32         (bk + bq folded on host)
    whc_ref,  # (hid, 1) f32         hidden weight as a column (MXU energies)
    out_ref,  # (TB, dim_v)
    w_ref,    # (TB, NKP)            lane-dense weights output
    *,
    n_keys,
    activation,
    lane_dense_softmax,
):
    tb, nkp, dim_k = k_ref.shape
    hid = wkT_ref.shape[1]

    # --- key projection: one large MXU matmul with M = TB * NKP.
    # The reshape is a free relayout because NKP % 8 == 0 (host-padded).
    k2 = k_ref[...].reshape(tb * nkp, dim_k)
    tk = jnp.dot(k2, wkT_ref[...], preferred_element_type=jnp.float32)
    # TODO(synk): F.dropout(p=0.1) on tk/tq treated as identity (eval mode).

    # --- query projection; key bias folded into bqk on the host.
    tq = jnp.dot(q_ref[...], wqT_ref[...], preferred_element_type=jnp.float32)
    tq = tq + bqk_ref[...]

    # activation(tk + tq), query term broadcast over the key axis.
    pre = tk.reshape(tb, nkp, hid) + tq[:, None, :]
    if activation == "relu":
        h = jnp.maximum(pre, 0.0)
    elif activation == "tanh":
        h = jnp.tanh(pre)
    else:
        raise ValueError(f"unsupported activation: {activation!r}")

    # --- energies on the MXU (vector-extended slot, idle at this point):
    # (TB*NKP, hid) @ (hid, 1).  The hidden bias bh is dropped (constant
    # shift: softmax-invariant, and the energies are never returned).
    e_col = jnp.dot(h.reshape(tb * nkp, hid), whc_ref[...],
                    preferred_element_type=jnp.float32)       # (TB*NKP, 1)

    if lane_dense_softmax:
        # One relayout, then max/exp/sum/reciprocal run on full 128-lane vregs.
        e = e_col.reshape(tb, nkp)                            # (TB, NKP)
        if nkp != n_keys:                                     # mask padded keys
            kidx = jax.lax.broadcasted_iota(jnp.int32, (tb, nkp), 1)
            e = jnp.where(kidx < n_keys, e, -1e30)
        m = jnp.max(e, axis=1, keepdims=True)
        p = jnp.exp(e - m)
        denom = jnp.sum(p, axis=1, keepdims=True)
        # Exact reciprocal: the *returned* weights should sum to 1.
        w = p * pl.reciprocal(denom, approx=False)            # (TB, NKP)
        w_ref[...] = w.astype(w_ref.dtype)                    # direct lane-dense store
        w3 = w.reshape(tb, nkp, 1)                            # small relayout for V weighting
    else:
        # Fallback path (sublane softmax) — identical math, known-good layout.
        e = e_col.reshape(tb, nkp, 1)                         # free relayout (NKP % 8 == 0)
        if nkp != n_keys:
            kidx = jax.lax.broadcasted_iota(jnp.int32, (tb, nkp, 1), 1)
            e = jnp.where(kidx < n_keys, e, -1e30)
        m = jnp.max(e, axis=1, keepdims=True)
        p = jnp.exp(e - m)
        denom = jnp.sum(p, axis=1, keepdims=True)
        w3 = p * pl.reciprocal(denom, approx=False)           # (TB, NKP, 1)
        w_ref[...] = jnp.sum(w3, axis=-1).astype(w_ref.dtype)

    # output[b, :] = sum_k w[b, k] * V[b, k, :]   (VPU mul + XLU sublane reduce;
    # V is promoted to f32 by the multiply with the f32 weights).
    out_ref[...] = jnp.sum(w3 * v_ref[...], axis=1).astype(out_ref.dtype)


def additive_attention(Q, K, V, params, *, activation="relu",
                       stream_dtype=jnp.bfloat16, block_b=None):
    """Q: [B, dim_q], K: [B, n_keys, dim_k], V: [B, n_keys, dim_v].

    Returns (output [B, dim_v], weights [B, n_keys]) like the PyTorch module.
    `stream_dtype=None` streams Q/K/V/weights in their original dtype.
    """
    out_dtype = Q.dtype
    B, dim_q = Q.shape
    _, n_keys, dim_k = K.shape
    dim_v = V.shape[-1]
    wk, bk, wq, bq, wh, _bh = params          # bh dropped: softmax-invariant
    hid = wk.shape[0]

    if stream_dtype is None:
        stream_dtype = out_dtype

    # Host-side, once: pre-transpose projection weights, fold bk into bq,
    # reshape the hidden weight as an (hid, 1) column for the MXU.
    wkT = wk.T.astype(stream_dtype)                       # (dim_k, hid)
    wqT = wq.T.astype(stream_dtype)                       # (dim_q, hid)
    bqk = (bk + bq).reshape(1, hid).astype(jnp.float32)   # (1, hid)
    whc = wh.reshape(hid, 1).astype(jnp.float32)          # (hid, 1)

    # Pad n_keys to a multiple of 8 so in-kernel reshapes are free relayouts;
    # padded keys are masked out of the softmax inside the kernel.
    nk_p = _round_up(n_keys, 8)
    if nk_p != n_keys:
        K = jnp.pad(K, ((0, 0), (0, nk_p - n_keys), (0, 0)))
        V = jnp.pad(V, ((0, 0), (0, nk_p - n_keys), (0, 0)))

    # ---- batch tile: generation-aware VMEM budget ---------------------------
    MiB = 1024 * 1024
    sb = jnp.dtype(stream_dtype).itemsize
    try:
        vmem_cap = int(pltpu.get_tpu_info().vmem_capacity_bytes)
    except Exception:                           # conservative: v7x per-core VMEM
        vmem_cap = 64 * MiB
    vmem_limit = max(32 * MiB, min(vmem_cap - 16 * MiB, 100 * MiB))

    krow = nk_p * _round_up(dim_k, 128) * sb              # per batch row, 1 buffer
    vrow = nk_p * _round_up(dim_v, 128) * sb
    qrow = _round_up(dim_q, 128) * sb
    hrow = nk_p * _round_up(hid, 128) * 4                 # f32 intermediates
    orow = _round_up(dim_v, 128) * 4
    wrow = _round_up(nk_p, 128) * 4
    vrow_f32 = nk_p * _round_up(dim_v, 128) * 4           # promoted V product
    per_row = 2 * (krow + vrow + qrow + orow + wrow) + 4 * hrow + 2 * vrow_f32
    const_bytes = (2 * (_round_up(dim_k, 8) + _round_up(dim_q, 8))
                   * _round_up(hid, 128) * sb
                   + 8 * _round_up(hid, 128) * 4)
    budget = int(vmem_limit * 0.75) - const_bytes

    if block_b is None:
        block_b = budget // max(1, per_row)
    # Keep >= 4 grid steps when B allows it: v7x's two TensorCores each get
    # >= 2 pipelined steps of the "parallel" batch axis (and DMA overlaps).
    block_b = min(int(block_b), _round_up(max(1, -(-B // 4)), 8))
    block_b = max(8, (int(block_b) // 8) * 8)
    tb = max(8, min(block_b, _round_up(B, 8)))

    n_blocks = -(-B // tb)
    Bp = n_blocks * tb
    if Bp != B:
        pad = Bp - B
        Q = jnp.pad(Q, ((0, pad), (0, 0)))
        K = jnp.pad(K, ((0, pad), (0, 0), (0, 0)))
        V = jnp.pad(V, ((0, pad), (0, 0), (0, 0)))

    Qs = Q.astype(stream_dtype)
    Ks = K.astype(stream_dtype)
    Vs = V.astype(stream_dtype)

    def _call(lane_dense, single_buffer_consts):
        kern = functools.partial(
            _additive_attention_kernel,
            n_keys=n_keys, activation=activation,
            lane_dense_softmax=lane_dense)
        const_kw = {"pipeline_mode": pl.Buffered(1)} if single_buffer_consts else {}

        def cspec(shape):
            return pl.BlockSpec(shape, lambda b: (0,) * len(shape), **const_kw)

        return pl.pallas_call(
            kern,
            out_shape=(
                jax.ShapeDtypeStruct((Bp, dim_v), out_dtype),
                jax.ShapeDtypeStruct((Bp, nk_p), out_dtype),
            ),
            grid_spec=pltpu.PrefetchScalarGridSpec(
                num_scalar_prefetch=0,
                grid=(n_blocks,),
                in_specs=[
                    pl.BlockSpec((tb, dim_q), lambda b: (b, 0)),
                    pl.BlockSpec((tb, nk_p, dim_k), lambda b: (b, 0, 0)),
                    pl.BlockSpec((tb, nk_p, dim_v), lambda b: (b, 0, 0)),
                    cspec((dim_k, hid)),
                    cspec((dim_q, hid)),
                    cspec((1, hid)),
                    cspec((hid, 1)),
                ],
                out_specs=[
                    pl.BlockSpec((tb, dim_v), lambda b: (b, 0)),
                    pl.BlockSpec((tb, nk_p), lambda b: (b, 0)),
                ],
            ),
            compiler_params=pltpu.CompilerParams(
                dimension_semantics=("parallel",),
                vmem_limit_bytes=int(vmem_limit),
            ),
        )(Qs, Ks, Vs, wkT, wqT, bqk, whc)

    # Preferred config first; degrade gracefully if a pipeline/layout feature
    # is unavailable on this jax / libtpu / chip-generation combination.
    last_err = None
    for lane_dense, single_buf in ((True, True), (True, False), (False, False)):
        try:
            out, weights = jax.block_until_ready(_call(lane_dense, single_buf))
            break
        except Exception as err:   # retry with a safer configuration
            last_err = err
    else:
        raise last_err

    return out[:B], weights[:B, :n_keys]


def _reference(Q, K, V, params):
    wk, bk, wq, bq, wh, bh = params
    tk = K @ wk.T + bk                           # (B, n_keys, hid)
    tq = Q @ wq.T + bq                           # (B, hid)
    h = jax.nn.relu(tk + tq[:, None, :])         # (B, n_keys, hid)
    e = h @ wh.T + bh                            # (B, n_keys, 1)
    w = jax.nn.softmax(e, axis=1)                # (B, n_keys, 1)
    out = jnp.einsum("bk,bkd->bd", w[..., 0], V)
    return out, w[..., 0]


if __name__ == "__main__":
    B, n_keys = 2, 8
    dim_k, dim_q, dim_v, hid = 16, 16, 16, 32

    key = jax.random.PRNGKey(0)
    ks = jax.random.split(key, 9)
    Q = jax.random.normal(ks[0], (B, dim_q), dtype=jnp.float32)
    K = jax.random.normal(ks[1], (B, n_keys, dim_k), dtype=jnp.float32)
    V = jax.random.normal(ks[2], (B, n_keys, dim_v), dtype=jnp.float32)

    # Deterministic parameter init (shapes match nn.Linear in the module).
    wk = jax.random.normal(ks[3], (hid, dim_k), dtype=jnp.float32) * 0.1
    bk = jax.random.normal(ks[4], (hid,), dtype=jnp.float32) * 0.1
    wq = jax.random.normal(ks[5], (hid, dim_q), dtype=jnp.float32) * 0.1
    bq = jax.random.normal(ks[6], (hid,), dtype=jnp.float32) * 0.1
    wh = jax.random.normal(ks[7], (1, hid), dtype=jnp.float32) * 0.1
    bh = jax.random.normal(ks[8], (1,), dtype=jnp.float32) * 0.1
    params = (wk, bk, wq, bq, wh, bh)

    out_ref, w_ref = _reference(Q, K, V, params)

    # 1) Default config: bf16-streamed Q/K/V + weights, f32 accumulation/softmax.
    out, weights = additive_attention(Q, K, V, params)
    jax.block_until_ready((out, weights))
    assert out.shape == (B, dim_v) and weights.shape == (B, n_keys)
    assert jnp.allclose(out, out_ref, atol=3e-2, rtol=3e-2)
    assert jnp.allclose(weights, w_ref, atol=1e-2, rtol=1e-2)
    assert jnp.allclose(jnp.sum(weights, axis=-1), 1.0, atol=1e-3)

    # 2) f32 streaming with a ragged key count (exercises the key-pad mask path).
    n_keys2 = 5
    K2, V2 = K[:, :n_keys2], V[:, :n_keys2]
    out2, weights2 = additive_attention(Q, K2, V2, params, stream_dtype=None)
    jax.block_until_ready((out2, weights2))
    out2_ref, w2_ref = _reference(Q, K2, V2, params)
    assert out2.shape == (B, dim_v) and weights2.shape == (B, n_keys2)
    assert jnp.allclose(out2, out2_ref, atol=2e-3, rtol=2e-3)
    assert jnp.allclose(weights2, w2_ref, atol=2e-3, rtol=2e-3)

    print("KERNEL_OK")
</pallas_src>

<mosaic_0001>
module attributes {stable_mosaic.version = 11 : i64} {
  func.func @_additive_attention_kernel(%arg0: i32, %arg1: memref<8x16xbf16, #tpu.memory_space<vmem>>, %arg2: memref<8x8x16xbf16, #tpu.memory_space<vmem>>, %arg3: memref<8x8x16xbf16, #tpu.memory_space<vmem>>, %arg4: memref<16x32xbf16, #tpu.memory_space<vmem>>, %arg5: memref<16x32xbf16, #tpu.memory_space<vmem>>, %arg6: memref<1x32xf32, #tpu.memory_space<vmem>>, %arg7: memref<32x1xf32, #tpu.memory_space<vmem>>, %arg8: memref<8x16xf32, #tpu.memory_space<vmem>>, %arg9: memref<8x8xf32, #tpu.memory_space<vmem>>) attributes {dimension_semantics = [#tpu.dimension_semantics<parallel>], iteration_bounds = array<i64: 1>, scalar_prefetch = 0 : i64, scratch_operands = 0 : i64, tpu.core_type = #tpu.core_type<tc>, window_params = [{transform_indices = @transform_0, window_bounds = array<i64: 8, 16>}, {transform_indices = @transform_1, window_bounds = array<i64: 8, 8, 16>}, {transform_indices = @transform_2, window_bounds = array<i64: 8, 8, 16>}, {pipeline_mode = #tpu.pipeline_mode<synchronous>, transform_indices = @transform_3, window_bounds = array<i64: 16, 32>}, {pipeline_mode = #tpu.pipeline_mode<synchronous>, transform_indices = @transform_4, window_bounds = array<i64: 16, 32>}, {pipeline_mode = #tpu.pipeline_mode<synchronous>, transform_indices = @transform_5, window_bounds = array<i64: 1, 32>}, {pipeline_mode = #tpu.pipeline_mode<synchronous>, transform_indices = @transform_6, window_bounds = array<i64: 32, 1>}, {transform_indices = @transform_7, window_bounds = array<i64: 8, 16>}, {transform_indices = @transform_8, window_bounds = array<i64: 8, 8>}]} {
    %c0 = arith.constant 0 : index
    %c0_0 = arith.constant 0 : index
    %c0_1 = arith.constant 0 : index
    %0 = vector.load %arg2[%c0, %c0_0, %c0_1] : memref<8x8x16xbf16, #tpu.memory_space<vmem>>, vector<8x8x16xbf16>
    %1 = vector.shape_cast %0 : vector<8x8x16xbf16> to vector<64x16xbf16>
    %c0_2 = arith.constant 0 : index
    %c0_3 = arith.constant 0 : index
    %2 = vector.load %arg4[%c0_2, %c0_3] : memref<16x32xbf16, #tpu.memory_space<vmem>>, vector<16x32xbf16>
    %cst = arith.constant dense<0.000000e+00> : vector<64x32xf32>
    %3 = tpu.matmul %1, %2, %cst {dimension_numbers = #tpu.dot_dimension_numbers<[1], [0], [0], [1], [0, 0, 1, 1], [], []>} : vector<64x16xbf16>, vector<16x32xbf16>, vector<64x32xf32> -> vector<64x32xf32>
    %c0_4 = arith.constant 0 : index
    %c0_5 = arith.constant 0 : index
    %4 = vector.load %arg1[%c0_4, %c0_5] : memref<8x16xbf16, #tpu.memory_space<vmem>>, vector<8x16xbf16>
    %c0_6 = arith.constant 0 : index
    %c0_7 = arith.constant 0 : index
    %5 = vector.load %arg5[%c0_6, %c0_7] : memref<16x32xbf16, #tpu.memory_space<vmem>>, vector<16x32xbf16>
    %cst_8 = arith.constant dense<0.000000e+00> : vector<8x32xf32>
    %6 = tpu.matmul %4, %5, %cst_8 {dimension_numbers = #tpu.dot_dimension_numbers<[1], [0], [0], [1], [0, 0, 1, 1], [], []>} : vector<8x16xbf16>, vector<16x32xbf16>, vector<8x32xf32> -> vector<8x32xf32>
    %c0_9 = arith.constant 0 : index
    %c0_10 = arith.constant 0 : index
    %7 = vector.load %arg6[%c0_9, %c0_10] : memref<1x32xf32, #tpu.memory_space<vmem>>, vector<1x32xf32>
    %8 = vector.broadcast %7 : vector<1x32xf32> to vector<8x32xf32>
    %9 = arith.addf %6, %8 : vector<8x32xf32>
    %10 = vector.shape_cast %3 : vector<64x32xf32> to vector<8x8x32xf32>
    %11 = vector.shape_cast %9 : vector<8x32xf32> to vector<8x1x32xf32>
    %12 = vector.broadcast %11 : vector<8x1x32xf32> to vector<8x8x32xf32>
    %13 = arith.addf %10, %12 : vector<8x8x32xf32>
    %cst_11 = arith.constant 0.000000e+00 : f32
    %14 = vector.broadcast %cst_11 : f32 to vector<8x8x32xf32>
    %15 = arith.maximumf %13, %14 : vector<8x8x32xf32>
    %16 = vector.shape_cast %15 : vector<8x8x32xf32> to vector<64x32xf32>
    %c0_12 = arith.constant 0 : index
    %c0_13 = arith.constant 0 : index
    %17 = vector.load %arg7[%c0_12, %c0_13] : memref<32x1xf32, #tpu.memory_space<vmem>>, vector<32x1xf32>
    %cst_14 = arith.constant dense<0.000000e+00> : vector<64x1xf32>
    %18 = tpu.matmul %16, %17, %cst_14 {dimension_numbers = #tpu.dot_dimension_numbers<[1], [0], [0], [1], [0, 0, 1, 1], [], []>} : vector<64x32xf32>, vector<32x1xf32>, vector<64x1xf32> -> vector<64x1xf32>
    %19 = vector.shape_cast %18 : vector<64x1xf32> to vector<8x8xf32>
    %cst_15 = arith.constant dense<0xFF800000> : vector<8xf32>
    %20 = vector.multi_reduction <maximumf>, %19, %cst_15 [1] : vector<8x8xf32> to vector<8xf32>
    %21 = vector.shape_cast %20 : vector<8xf32> to vector<8x1xf32>
    %22 = vector.broadcast %21 : vector<8x1xf32> to vector<8x8xf32>
    %23 = arith.subf %19, %22 : vector<8x8xf32>
    %24 = math.exp %23 : vector<8x8xf32>
    %cst_16 = arith.constant dense<0.000000e+00> : vector<8xf32>
    %25 = vector.multi_reduction <add>, %24, %cst_16 [1] : vector<8x8xf32> to vector<8xf32>
    %26 = vector.shape_cast %25 : vector<8xf32> to vector<8x1xf32>
    %27 = tpu.reciprocal %26 : vector<8x1xf32> -> vector<8x1xf32>
    %28 = vector.broadcast %27 : vector<8x1xf32> to vector<8x8xf32>
    %29 = arith.mulf %24, %28 : vector<8x8xf32>
    %c0_17 = arith.constant 0 : index
    %c0_18 = arith.constant 0 : index
    %30 = vector.load %arg9[%c0_17, %c0_18] : memref<8x8xf32, #tpu.memory_space<vmem>>, vector<8x8xf32>
    tpu.vector_store %arg9[%c0_17, %c0_18], %29 {strides = array<i32>} : memref<8x8xf32, #tpu.memory_space<vmem>>, vector<8x8xf32>,
    %31 = vector.shape_cast %29 : vector<8x8xf32> to vector<8x8x1xf32>
    %c0_19 = arith.constant 0 : index
    %c0_20 = arith.constant 0 : index
    %c0_21 = arith.constant 0 : index
    %32 = vector.load %arg3[%c0_19, %c0_20, %c0_21] : memref<8x8x16xbf16, #tpu.memory_space<vmem>>, vector<8x8x16xbf16>
    %33 = arith.extf %32 : vector<8x8x16xbf16> to vector<8x8x16xf32>
    %34 = vector.broadcast %31 : vector<8x8x1xf32> to vector<8x8x16xf32>
    %35 = arith.mulf %34, %33 : vector<8x8x16xf32>
    %cst_22 = arith.constant dense<0.000000e+00> : vector<8x16xf32>
    %36 = vector.multi_reduction <add>, %35, %cst_22 [1] : vector<8x8x16xf32> to vector<8x16xf32>
    %c0_23 = arith.constant 0 : index
    %c0_24 = arith.constant 0 : index
    %37 = vector.load %arg8[%c0_23, %c0_24] : memref<8x16xf32, #tpu.memory_space<vmem>>, vector<8x16xf32>
    tpu.vector_store %arg8[%c0_23, %c0_24], %36 {strides = array<i32>} : memref<8x16xf32, #tpu.memory_space<vmem>>, vector<8x16xf32>,
    return
  }
  func.func @transform_0(%arg0: i32) -> (i32, i32) {
    %c0_i32 = arith.constant 0 : i32
    %c0_i32_0 = arith.constant 0 : i32
    return %arg0, %c0_i32 : i32, i32
  }
  func.func @transform_1(%arg0: i32) -> (i32, i32, i32) {
    %c0_i32 = arith.constant 0 : i32
    %c0_i32_0 = arith.constant 0 : i32
    %c0_i32_1 = arith.constant 0 : i32
    return %arg0, %c0_i32, %c0_i32_0 : i32, i32, i32
  }
  func.func @transform_2(%arg0: i32) -> (i32, i32, i32) {
    %c0_i32 = arith.constant 0 : i32
    %c0_i32_0 = arith.constant 0 : i32
    %c0_i32_1 = arith.constant 0 : i32
    return %arg0, %c0_i32, %c0_i32_0 : i32, i32, i32
  }
  func.func @transform_3(%arg0: i32) -> (i32, i32) {
    %c0_i32 = arith.constant 0 : i32
    %c0_i32_0 = arith.constant 0 : i32
    %c0_i32_1 = arith.constant 0 : i32
    return %c0_i32, %c0_i32_0 : i32, i32
  }
  func.func @transform_4(%arg0: i32) -> (i32, i32) {
    %c0_i32 = arith.constant 0 : i32
    %c0_i32_0 = arith.constant 0 : i32
    %c0_i32_1 = arith.constant 0 : i32
    return %c0_i32, %c0_i32_0 : i32, i32
  }
  func.func @transform_5(%arg0: i32) -> (i32, i32) {
    %c0_i32 = arith.constant 0 : i32
    %c0_i32_0 = arith.constant 0 : i32
    %c0_i32_1 = arith.constant 0 : i32
    return %c0_i32, %c0_i32_0 : i32, i32
  }
  func.func @transform_6(%arg0: i32) -> (i32, i32) {
    %c0_i32 = arith.constant 0 : i32
    %c0_i32_0 = arith.constant 0 : i32
    %c0_i32_1 = arith.constant 0 : i32
    return %c0_i32, %c0_i32_0 : i32, i32
  }
  func.func @transform_7(%arg0: i32) -> (i32, i32) {
    %c0_i32 = arith.constant 0 : i32
    %c0_i32_0 = arith.constant 0 : i32
    return %arg0, %c0_i32 : i32, i32
  }
  func.func @transform_8(%arg0: i32) -> (i32, i32) {
    %c0_i32 = arith.constant 0 : i32
    %c0_i32_0 = arith.constant 0 : i32
    return %arg0, %c0_i32 : i32, i32
  }
}

module attributes {stable_mosaic.version = 11 : i64} {
  func.func @_additive_attention_kernel(%arg0: i32, %arg1: memref<8x16xbf16, #tpu.memory_space<vmem>>, %arg2: memref<8x8x16xbf16, #tpu.memory_space<vmem>>, %arg3: memref<8x8x16xbf16, #tpu.memory_space<vmem>>, %arg4: memref<16x32xbf16, #tpu.memory_space<vmem>>, %arg5: memref<16x32xbf16, #tpu.memory_space<vmem>>, %arg6: memref<1x32xf32, #tpu.memory_space<vmem>>, %arg7: memref<32x1xf32, #tpu.memory_space<vmem>>, %arg8: memref<8x16xf32, #tpu.memory_space<vmem>>, %arg9: memref<8x8xf32, #tpu.memory_space<vmem>>) attributes {dimension_semantics = [#tpu.dimension_semantics<parallel>], iteration_bounds = array<i64: 1>, scalar_prefetch = 0 : i64, scratch_operands = 0 : i64, tpu.core_type = #tpu.core_type<tc>, window_params = [{transform_indices = @transform_0, window_bounds = array<i64: 8, 16>}, {transform_indices = @transform_1, window_bounds = array<i64: 8, 8, 16>}, {transform_indices = @transform_2, window_bounds = array<i64: 8, 8, 16>}, {pipeline_mode = #tpu.pipeline_mode<synchronous>, transform_indices = @transform_3, window_bounds = array<i64: 16, 32>}, {pipeline_mode = #tpu.pipeline_mode<synchronous>, transform_indices = @transform_4, window_bounds = array<i64: 16, 32>}, {pipeline_mode = #tpu.pipeline_mode<synchronous>, transform_indices = @transform_5, window_bounds = array<i64: 1, 32>}, {pipeline_mode = #tpu.pipeline_mode<synchronous>, transform_indices = @transform_6, window_bounds = array<i64: 32, 1>}, {transform_indices = @transform_7, window_bounds = array<i64: 8, 16>}, {transform_indices = @transform_8, window_bounds = array<i64: 8, 8>}]} {
    %c0 = arith.constant 0 : index
    %c0_0 = arith.constant 0 : index
    %c0_1 = arith.constant 0 : index
    %0 = vector.load %arg2[%c0, %c0_0, %c0_1] : memref<8x8x16xbf16, #tpu.memory_space<vmem>>, vector<8x8x16xbf16>
    %1 = vector.shape_cast %0 : vector<8x8x16xbf16> to vector<64x16xbf16>
    %c0_2 = arith.constant 0 : index
    %c0_3 = arith.constant 0 : index
    %2 = vector.load %arg4[%c0_2, %c0_3] : memref<16x32xbf16, #tpu.memory_space<vmem>>, vector<16x32xbf16>
    %cst = arith.constant dense<0.000000e+00> : vector<64x32xf32>
    %3 = tpu.matmul %1, %2, %cst {dimension_numbers = #tpu.dot_dimension_numbers<[1], [0], [0], [1], [0, 0, 1, 1], [], []>} : vector<64x16xbf16>, vector<16x32xbf16>, vector<64x32xf32> -> vector<64x32xf32>
    %c0_4 = arith.constant 0 : index
    %c0_5 = arith.constant 0 : index
    %4 = vector.load %arg1[%c0_4, %c0_5] : memref<8x16xbf16, #tpu.memory_space<vmem>>, vector<8x16xbf16>
    %c0_6 = arith.constant 0 : index
    %c0_7 = arith.constant 0 : index
    %5 = vector.load %arg5[%c0_6, %c0_7] : memref<16x32xbf16, #tpu.memory_space<vmem>>, vector<16x32xbf16>
    %cst_8 = arith.constant dense<0.000000e+00> : vector<8x32xf32>
    %6 = tpu.matmul %4, %5, %cst_8 {dimension_numbers = #tpu.dot_dimension_numbers<[1], [0], [0], [1], [0, 0, 1, 1], [], []>} : vector<8x16xbf16>, vector<16x32xbf16>, vector<8x32xf32> -> vector<8x32xf32>
    %c0_9 = arith.constant 0 : index
    %c0_10 = arith.constant 0 : index
    %7 = vector.load %arg6[%c0_9, %c0_10] : memref<1x32xf32, #tpu.memory_space<vmem>>, vector<1x32xf32>
    %8 = vector.broadcast %7 : vector<1x32xf32> to vector<8x32xf32>
    %9 = arith.addf %6, %8 : vector<8x32xf32>
    %10 = vector.shape_cast %3 : vector<64x32xf32> to vector<8x8x32xf32>
    %11 = vector.shape_cast %9 : vector<8x32xf32> to vector<8x1x32xf32>
    %12 = vector.broadcast %11 : vector<8x1x32xf32> to vector<8x8x32xf32>
    %13 = arith.addf %10, %12 : vector<8x8x32xf32>
    %cst_11 = arith.constant 0.000000e+00 : f32
    %14 = vector.broadcast %cst_11 : f32 to vector<8x8x32xf32>
    %15 = arith.maximumf %13, %14 : vector<8x8x32xf32>
    %16 = vector.shape_cast %15 : vector<8x8x32xf32> to vector<64x32xf32>
    %c0_12 = arith.constant 0 : index
    %c0_13 = arith.constant 0 : index
    %17 = vector.load %arg7[%c0_12, %c0_13] : memref<32x1xf32, #tpu.memory_space<vmem>>, vector<32x1xf32>
    %cst_14 = arith.constant dense<0.000000e+00> : vector<64x1xf32>
    %18 = tpu.matmul %16, %17, %cst_14 {dimension_numbers = #tpu.dot_dimension_numbers<[1], [0], [0], [1], [0, 0, 1, 1], [], []>} : vector<64x32xf32>, vector<32x1xf32>, vector<64x1xf32> -> vector<64x1xf32>
    %19 = vector.shape_cast %18 : vector<64x1xf32> to vector<8x8xf32>
    %cst_15 = arith.constant dense<0xFF800000> : vector<8xf32>
    %20 = vector.multi_reduction <maximumf>, %19, %cst_15 [1] : vector<8x8xf32> to vector<8xf32>
    %21 = vector.shape_cast %20 : vector<8xf32> to vector<8x1xf32>
    %22 = vector.broadcast %21 : vector<8x1xf32> to vector<8x8xf32>
    %23 = arith.subf %19, %22 : vector<8x8xf32>
    %24 = math.exp %23 : vector<8x8xf32>
    %cst_16 = arith.constant dense<0.000000e+00> : vector<8xf32>
    %25 = vector.multi_reduction <add>, %24, %cst_16 [1] : vector<8x8xf32> to vector<8xf32>
    %26 = vector.shape_cast %25 : vector<8xf32> to vector<8x1xf32>
    %27 = tpu.reciprocal %26 : vector<8x1xf32> -> vector<8x1xf32>
    %28 = vector.broadcast %27 : vector<8x1xf32> to vector<8x8xf32>
    %29 = arith.mulf %24, %28 : vector<8x8xf32>
    %c0_17 = arith.constant 0 : index
    %c0_18 = arith.constant 0 : index
    %30 = vector.load %arg9[%c0_17, %c0_18] : memref<8x8xf32, #tpu.memory_space<vmem>>, vector<8x8xf32>
    tpu.vector_store %arg9[%c0_17, %c0_18], %29 {strides = array<i32>} : memref<8x8xf32, #tpu.memory_space<vmem>>, vector<8x8xf32>,
    %31 = vector.shape_cast %29 : vector<8x8xf32> to vector<8x8x1xf32>
    %c0_19 = arith.constant 0 : index
    %c0_20 = arith.constant 0 : index
    %c0_21 = arith.constant 0 : index
    %32 = vector.load %arg3[%c0_19, %c0_20, %c0_21] : memref<8x8x16xbf16, #tpu.memory_space<vmem>>, vector<8x8x16xbf16>
    %33 = arith.extf %32 : vector<8x8x16xbf16> to vector<8x8x16xf32>
    %34 = vector.broadcast %31 : vector<8x8x1xf32> to vector<8x8x16xf32>
    %35 = arith.mulf %34, %33 : vector<8x8x16xf32>
    %cst_22 = arith.constant dense<0.000000e+00> : vector<8x16xf32>
    %36 = vector.multi_reduction <add>, %35, %cst_22 [1] : vector<8x8x16xf32> to vector<8x16xf32>
    %c0_23 = arith.constant 0 : index
    %c0_24 = arith.constant 0 : index
    %37 = vector.load %arg8[%c0_23, %c0_24] : memref<8x16xf32, #tpu.memory_space<vmem>>, vector<8x16xf32>
    tpu.vector_store %arg8[%c0_23, %c0_24], %36 {strides = array<i32>} : memref<8x16xf32, #tpu.memory_space<vmem>>, vector<8x16xf32>,
    return
  }
  func.func @transform_0(%arg0: i32) -> (i32, i32) {
    %c0_i32 = arith.constant 0 : i32
    %c0_i32_0 = arith.constant 0 : i32
    return %arg0, %c0_i32 : i32, i32
  }
  func.func @transform_1(%arg0: i32) -> (i32, i32, i32) {
    %c0_i32 = arith.constant 0 : i32
    %c0_i32_0 = arith.constant 0 : i32
    %c0_i32_1 = arith.constant 0 : i32
    return %arg0, %c0_i32, %c0_i32_0 : i32, i32, i32
  }
  func.func @transform_2(%arg0: i32) -> (i32, i32, i32) {
    %c0_i32 = arith.constant 0 : i32
    %c0_i32_0 = arith.constant 0 : i32
    %c0_i32_1 = arith.constant 0 : i32
    return %arg0, %c0_i32, %c0_i32_0 : i32, i32, i32
  }
  func.func @transform_3(%arg0: i32) -> (i32, i32) {
    %c0_i32 = arith.constant 0 : i32
    %c0_i32_0 = arith.constant 0 : i32
    %c0_i32_1 = arith.constant 0 : i32
    return %c0_i32, %c0_i32_0 : i32, i32
  }
  func.func @transform_4(%arg0: i32) -> (i32, i32) {
    %c0_i32 = arith.constant 0 : i32
    %c0_i32_0 = arith.constant 0 : i32
    %c0_i32_1 = arith.constant 0 : i32
    return %c0_i32, %c0_i32_0 : i32, i32
  }
  func.func @transform_5(%arg0: i32) -> (i32, i32) {
    %c0_i32 = arith.constant 0 : i32
    %c0_i32_0 = arith.constant 0 : i32
    %c0_i32_1 = arith.constant 0 : i32
    return %c0_i32, %c0_i32_0 : i32, i32
  }
  func.func @transform_6(%arg0: i32) -> (i32, i32) {
    %c0_i32 = arith.constant 0 : i32
    %c0_i32_0 = arith.constant 0 : i32
    %c0_i32_1 = arith.constant 0 : i32
    return %c0_i32, %c0_i32_0 : i32, i32
  }
  func.func @transform_7(%arg0: i32) -> (i32, i32) {
    %c0_i32 = arith.constant 0 : i32
    %c0_i32_0 = arith.constant 0 : i32
    return %arg0, %c0_i32 : i32, i32
  }
  func.func @transform_8(%arg0: i32) -> (i32, i32) {
    %c0_i32 = arith.constant 0 : i32
    %c0_i32_0 = arith.constant 0 : i32
    return %arg0, %c0_i32 : i32, i32
  }
}

module attributes {stable_mosaic.version = 11 : i64} {
  func.func @_additive_attention_kernel(%arg0: i32, %arg1: memref<8x16xbf16, #tpu.memory_space<vmem>>, %arg2: memref<8x8x16xbf16, #tpu.memory_space<vmem>>, %arg3: memref<8x8x16xbf16, #tpu.memory_space<vmem>>, %arg4: memref<16x32xbf16, #tpu.memory_space<vmem>>, %arg5: memref<16x32xbf16, #tpu.memory_space<vmem>>, %arg6: memref<1x32xf32, #tpu.memory_space<vmem>>, %arg7: memref<32x1xf32, #tpu.memory_space<vmem>>, %arg8: memref<8x16xf32, #tpu.memory_space<vmem>>, %arg9: memref<8x8xf32, #tpu.memory_space<vmem>>) attributes {dimension_semantics = [#tpu.dimension_semantics<parallel>], iteration_bounds = array<i64: 1>, scalar_prefetch = 0 : i64, scratch_operands = 0 : i64, tpu.core_type = #tpu.core_type<tc>, window_params = [{transform_indices = @transform_0, window_bounds = array<i64: 8, 16>}, {transform_indices = @transform_1, window_bounds = array<i64: 8, 8, 16>}, {transform_indices = @transform_2, window_bounds = array<i64: 8, 8, 16>}, {pipeline_mode = #tpu.pipeline_mode<synchronous>, transform_indices = @transform_3, window_bounds = array<i64: 16, 32>}, {pipeline_mode = #tpu.pipeline_mode<synchronous>, transform_indices = @transform_4, window_bounds = array<i64: 16, 32>}, {pipeline_mode = #tpu.pipeline_mode<synchronous>, transform_indices = @transform_5, window_bounds = array<i64: 1, 32>}, {pipeline_mode = #tpu.pipeline_mode<synchronous>, transform_indices = @transform_6, window_bounds = array<i64: 32, 1>}, {transform_indices = @transform_7, window_bounds = array<i64: 8, 16>}, {transform_indices = @transform_8, window_bounds = array<i64: 8, 8>}]} {
    %c0 = arith.constant 0 : index
    %c0_0 = arith.constant 0 : index
    %c0_1 = arith.constant 0 : index
    %0 = vector.load %arg2[%c0, %c0_0, %c0_1] : memref<8x8x16xbf16, #tpu.memory_space<vmem>>, vector<8x8x16xbf16>
    %1 = vector.shape_cast %0 : vector<8x8x16xbf16> to vector<64x16xbf16>
    %c0_2 = arith.constant 0 : index
    %c0_3 = arith.constant 0 : index
    %2 = vector.load %arg4[%c0_2, %c0_3] : memref<16x32xbf16, #tpu.memory_space<vmem>>, vector<16x32xbf16>
    %cst = arith.constant dense<0.000000e+00> : vector<64x32xf32>
    %3 = tpu.matmul %1, %2, %cst {dimension_numbers = #tpu.dot_dimension_numbers<[1], [0], [0], [1], [0, 0, 1, 1], [], []>} : vector<64x16xbf16>, vector<16x32xbf16>, vector<64x32xf32> -> vector<64x32xf32>
    %c0_4 = arith.constant 0 : index
    %c0_5 = arith.constant 0 : index
    %4 = vector.load %arg1[%c0_4, %c0_5] : memref<8x16xbf16, #tpu.memory_space<vmem>>, vector<8x16xbf16>
    %c0_6 = arith.constant 0 : index
    %c0_7 = arith.constant 0 : index
    %5 = vector.load %arg5[%c0_6, %c0_7] : memref<16x32xbf16, #tpu.memory_space<vmem>>, vector<16x32xbf16>
    %cst_8 = arith.constant dense<0.000000e+00> : vector<8x32xf32>
    %6 = tpu.matmul %4, %5, %cst_8 {dimension_numbers = #tpu.dot_dimension_numbers<[1], [0], [0], [1], [0, 0, 1, 1], [], []>} : vector<8x16xbf16>, vector<16x32xbf16>, vector<8x32xf32> -> vector<8x32xf32>
    %c0_9 = arith.constant 0 : index
    %c0_10 = arith.constant 0 : index
    %7 = vector.load %arg6[%c0_9, %c0_10] : memref<1x32xf32, #tpu.memory_space<vmem>>, vector<1x32xf32>
    %8 = vector.broadcast %7 : vector<1x32xf32> to vector<8x32xf32>
    %9 = arith.addf %6, %8 : vector<8x32xf32>
    %10 = vector.shape_cast %3 : vector<64x32xf32> to vector<8x8x32xf32>
    %11 = vector.shape_cast %9 : vector<8x32xf32> to vector<8x1x32xf32>
    %12 = vector.broadcast %11 : vector<8x1x32xf32> to vector<8x8x32xf32>
    %13 = arith.addf %10, %12 : vector<8x8x32xf32>
    %cst_11 = arith.constant 0.000000e+00 : f32
    %14 = vector.broadcast %cst_11 : f32 to vector<8x8x32xf32>
    %15 = arith.maximumf %13, %14 : vector<8x8x32xf32>
    %16 = vector.shape_cast %15 : vector<8x8x32xf32> to vector<64x32xf32>
    %c0_12 = arith.constant 0 : index
    %c0_13 = arith.constant 0 : index
    %17 = vector.load %arg7[%c0_12, %c0_13] : memref<32x1xf32, #tpu.memory_space<vmem>>, vector<32x1xf32>
    %cst_14 = arith.constant dense<0.000000e+00> : vector<64x1xf32>
    %18 = tpu.matmul %16, %17, %cst_14 {dimension_numbers = #tpu.dot_dimension_numbers<[1], [0], [0], [1], [0, 0, 1, 1], [], []>} : vector<64x32xf32>, vector<32x1xf32>, vector<64x1xf32> -> vector<64x1xf32>
    %19 = vector.shape_cast %18 : vector<64x1xf32> to vector<8x8x1xf32>
    %cst_15 = arith.constant dense<0xFF800000> : vector<8x1xf32>
    %20 = vector.multi_reduction <maximumf>, %19, %cst_15 [1] : vector<8x8x1xf32> to vector<8x1xf32>
    %21 = vector.shape_cast %20 : vector<8x1xf32> to vector<8x1x1xf32>
    %22 = vector.broadcast %21 : vector<8x1x1xf32> to vector<8x8x1xf32>
    %23 = arith.subf %19, %22 : vector<8x8x1xf32>
    %24 = math.exp %23 : vector<8x8x1xf32>
    %cst_16 = arith.constant dense<0.000000e+00> : vector<8x1xf32>
    %25 = vector.multi_reduction <add>, %24, %cst_16 [1] : vector<8x8x1xf32> to vector<8x1xf32>
    %26 = vector.shape_cast %25 : vector<8x1xf32> to vector<8x1x1xf32>
    %27 = tpu.reciprocal %26 : vector<8x1x1xf32> -> vector<8x1x1xf32>
    %28 = vector.broadcast %27 : vector<8x1x1xf32> to vector<8x8x1xf32>
    %29 = arith.mulf %24, %28 : vector<8x8x1xf32>
    %cst_17 = arith.constant dense<0.000000e+00> : vector<8x8xf32>
    %30 = vector.multi_reduction <add>, %29, %cst_17 [2] : vector<8x8x1xf32> to vector<8x8xf32>
    %c0_18 = arith.constant 0 : index
    %c0_19 = arith.constant 0 : index
    %31 = vector.load %arg9[%c0_18, %c0_19] : memref<8x8xf32, #tpu.memory_space<vmem>>, vector<8x8xf32>
    tpu.vector_store %arg9[%c0_18, %c0_19], %30 {strides = array<i32>} : memref<8x8xf32, #tpu.memory_space<vmem>>, vector<8x8xf32>,
    %c0_20 = arith.constant 0 : index
    %c0_21 = arith.constant 0 : index
    %c0_22 = arith.constant 0 : index
    %32 = vector.load %arg3[%c0_20, %c0_21, %c0_22] : memref<8x8x16xbf16, #tpu.memory_space<vmem>>, vector<8x8x16xbf16>
    %33 = arith.extf %32 : vector<8x8x16xbf16> to vector<8x8x16xf32>
    %34 = vector.broadcast %29 : vector<8x8x1xf32> to vector<8x8x16xf32>
    %35 = arith.mulf %34, %33 : vector<8x8x16xf32>
    %cst_23 = arith.constant dense<0.000000e+00> : vector<8x16xf32>
    %36 = vector.multi_reduction <add>, %35, %cst_23 [1] : vector<8x8x16xf32> to vector<8x16xf32>
    %c0_24 = arith.constant 0 : index
    %c0_25 = arith.constant 0 : index
    %37 = vector.load %arg8[%c0_24, %c0_25] : memref<8x16xf32, #tpu.memory_space<vmem>>, vector<8x16xf32>
    tpu.vector_store %arg8[%c0_24, %c0_25], %36 {strides = array<i32>} : memref<8x16xf32, #tpu.memory_space<vmem>>, vector<8x16xf32>,
    return
  }
  func.func @transform_0(%arg0: i32) -> (i32, i32) {
    %c0_i32 = arith.constant 0 : i32
    %c0_i32_0 = arith.constant 0 : i32
    return %arg0, %c0_i32 : i32, i32
  }
  func.func @transform_1(%arg0: i32) -> (i32, i32, i32) {
    %c0_i32 = arith.constant 0 : i32
    %c0_i32_0 = arith.constant 0 : i32
    %c0_i32_1 = arith.constant 0 : i32
    return %arg0, %c0_i32, %c0_i32_0 : i32, i32, i32
  }
  func.func @transform_2(%arg0: i32) -> (i32, i32, i32) {
    %c0_i32 = arith.constant 0 : i32
    %c0_i32_0 = arith.constant 0 : i32
    %c0_i32_1 = arith.constant 0 : i32
    return %arg0, %c0_i32, %c0_i32_0 : i32, i32, i32
  }
  func.func @transform_3(%arg0: i32) -> (i32, i32) {
    %c0_i32 = arith.constant 0 : i32
    %c0_i32_0 = arith.constant 0 : i32
    %c0_i32_1 = arith.constant 0 : i32
    return %c0_i32, %c0_i32_0 : i32, i32
  }
  func.func @transform_4(%arg0: i32) -> (i32, i32) {
    %c0_i32 = arith.constant 0 : i32
    %c0_i32_0 = arith.constant 0 : i32
    %c0_i32_1 = arith.constant 0 : i32
    return %c0_i32, %c0_i32_0 : i32, i32
  }
  func.func @transform_5(%arg0: i32) -> (i32, i32) {
    %c0_i32 = arith.constant 0 : i32
    %c0_i32_0 = arith.constant 0 : i32
    %c0_i32_1 = arith.constant 0 : i32
    return %c0_i32, %c0_i32_0 : i32, i32
  }
  func.func @transform_6(%arg0: i32) -> (i32, i32) {
    %c0_i32 = arith.constant 0 : i32
    %c0_i32_0 = arith.constant 0 : i32
    %c0_i32_1 = arith.constant 0 : i32
    return %c0_i32, %c0_i32_0 : i32, i32
  }
  func.func @transform_7(%arg0: i32) -> (i32, i32) {
    %c0_i32 = arith.constant 0 : i32
    %c0_i32_0 = arith.constant 0 : i32
    return %arg0, %c0_i32 : i32, i32
  }
  func.func @transform_8(%arg0: i32) -> (i32, i32) {
    %c0_i32 = arith.constant 0 : i32
    %c0_i32_0 = arith.constant 0 : i32
    return %arg0, %c0_i32 : i32, i32
  }
}

</mosaic_0001>

<llo_original>
// kernel: tpu_custom_call.1
$region0: #{tpu_custom_call.1}
  #allocation0 [shape = 'u32[]', space=smem, size = 0x4, offset = 0x4, fixed_abs, tag = 'smem constant byte address 0x4 - core index']
  #allocation1 [shape = 'u32[144,128]{1,0:T(1,128)}', space=vmem, size = 0x12000, scoped, tag = 'internal scratch']
  %s0 = inlined_call_operand.hbm [shape: bf16[8,16], index: 0, kind: input, shape index: {}]
  %s1 = inlined_call_operand.vmem [shape: bf16[8,8,16], index: 1, kind: input, shape index: {}]
  %s2 = inlined_call_operand.hbm [shape: bf16[8,8,16], index: 2, kind: input, shape index: {}]
  %s3 = inlined_call_operand.vmem [shape: bf16[16,32], index: 3, kind: input, shape index: {}]
  %s4 = inlined_call_operand.vmem [shape: bf16[16,32], index: 4, kind: input, shape index: {}]
  %s5 = inlined_call_operand.vmem [shape: f32[1,32], index: 5, kind: input, shape index: {}]
  %s6 = inlined_call_operand.vmem [shape: f32[32,1], index: 6, kind: input, shape index: {}]
  %s7 = inlined_call_operand.hbm [shape: f32[8,16], index: 7, kind: output, shape index: {0}]
  %s8 = inlined_call_operand.hbm [shape: f32[8,8], index: 8, kind: output, shape index: {1}]
  %9 = xla_tuple %s7, %s8
  %s10 = sld [smem:[#allocation0]]
  $region54: #{tpu_custom_call.1} parent=0
    _
  %s12 = ssub.s32 1, %s10
  %s13 = scalar_select 0, %s12, %s10
  $region1: #{tpu_custom_call.1} parent=0
    #allocation2 [shape = 'u8[2048]{0}', space=vmem, size = 0x800, scoped, tag = 'input window, operand 0, single buffered']
    #allocation3 [shape = 's32[1]{0}', space=sflag, size = 0x4, scoped, tag = 'scoped memory for tpu_custom_call.1']
    #allocation4 [shape = 's32[1]{0}', space=sflag, size = 0x4, scoped, tag = 'scoped memory for tpu_custom_call.1']
    #allocation5 [shape = 'u8[16384]{0}', space=vmem, size = 0x4000, scoped, tag = 'input window, operand 2, single buffered']
    #allocation6 [shape = 's32[1]{0}', space=sflag, size = 0x4, scoped, tag = 'scoped memory for tpu_custom_call.1']
    #allocation7 [shape = 'u8[4096]{0}', space=vmem, size = 0x1000, scoped, tag = 'output window, operand 0, single buffered']
    #allocation8 [shape = 'u8[4096]{0}', space=vmem, size = 0x1000, scoped, tag = 'output window, operand 1, single buffered']
    #allocation9 [shape = 's32[1]{0}', space=sflag, size = 0x4, scoped, tag = 'scoped memory for tpu_custom_call.1']
    %14 = vsyncpa [#allocation3], 0
    %15 = vsyncpa [#allocation6], 0
    %16 = vsyncpa [#allocation4], 0
    %17 = vsyncpa [#allocation9], 0
    // Predicated region
    $region2: #{tpu_custom_call.1} parent=1 // pred_check
      _
    $region3: #{tpu_custom_call.1} parent=1 // pred_check_branch
      %19 = sbr.rel (0) target = $region5
    $region4: #{tpu_custom_call.1} parent=1 // pred_region
      %s21 = ssub.s32 64, 64
      %22 = vsyncadd [#allocation3], %s21
      %s24 = sshll.u32 [#allocation2], 4
      %s25 = int_to_ptr.vmem [resolvable:$true] %s24
      %27 = dma.hbm_to_vmem [thread:$0]  %s0, 64, %s25, [#allocation3]
    $region5: #{tpu_custom_call.1} parent=1 // pred_fallthru
      _
    // Predicated region
    $region6: #{tpu_custom_call.1} parent=1 // pred_check
      _
    $region7: #{tpu_custom_call.1} parent=1 // pred_check_branch
      %29 = sbr.rel (0) target = $region9
    $region8: #{tpu_custom_call.1} parent=1 // pred_region
      _
    $region9: #{tpu_custom_call.1} parent=1 // pred_fallthru
      _
    // Predicated region
    $region10: #{tpu_custom_call.1} parent=1 // pred_check
      _
    $region11: #{tpu_custom_call.1} parent=1 // pred_check_branch
      %31 = sbr.rel (0) target = $region13
    $region12: #{tpu_custom_call.1} parent=1 // pred_region
      %s33 = ssub.s32 512, 512
      %34 = vsyncadd [#allocation6], %s33
      %s35 = sshll.u32 [#allocation5], 4
      %s36 = int_to_ptr.vmem [resolvable:$true] %s35
      %41 = dma.hbm_to_vmem [thread:$0]  %s2, 512, %s36, [#allocation6], 64, 64, 4
    $region13: #{tpu_custom_call.1} parent=1 // pred_fallthru
      _
    // Predicated region
    $region14: #{tpu_custom_call.1} parent=1 // pred_check
      _
    $region15: #{tpu_custom_call.1} parent=1 // pred_check_branch
      %43 = sbr.rel (0) target = $region17
    $region16: #{tpu_custom_call.1} parent=1 // pred_region
      _
    $region17: #{tpu_custom_call.1} parent=1 // pred_fallthru
      _
    // Predicated region
    $region18: #{tpu_custom_call.1} parent=1 // pred_check
      _
    $region19: #{tpu_custom_call.1} parent=1 // pred_check_branch
      %45 = sbr.rel (0) target = $region21
    $region20: #{tpu_custom_call.1} parent=1 // pred_region
      _
    $region21: #{tpu_custom_call.1} parent=1 // pred_fallthru
      _
    // Predicated region
    $region22: #{tpu_custom_call.1} parent=1 // pred_check
      _
    $region23: #{tpu_custom_call.1} parent=1 // pred_check_branch
      %47 = sbr.rel (0) target = $region25
    $region24: #{tpu_custom_call.1} parent=1 // pred_region
      _
    $region25: #{tpu_custom_call.1} parent=1 // pred_fallthru
      _
    // Predicated region
    $region26: #{tpu_custom_call.1} parent=1 // pred_check
      _
    $region27: #{tpu_custom_call.1} parent=1 // pred_check_branch
      %49 = sbr.rel (0) target = $region29
    $region28: #{tpu_custom_call.1} parent=1 // pred_region
      _
    $region29: #{tpu_custom_call.1} parent=1 // pred_fallthru
      _
    // Predicated region
    $region30: #{tpu_custom_call.1} parent=1 // pred_check
      _
    $region31: #{tpu_custom_call.1} parent=1 // pred_check_branch
      %51 = sbr.rel (0) target = $region33
    $region32: #{tpu_custom_call.1} parent=1 // pred_region
      %52 = dma.done [#allocation3], 64
    $region33: #{tpu_custom_call.1} parent=1 // pred_fallthru
      _
    // Predicated region
    $region34: #{tpu_custom_call.1} parent=1 // pred_check
      _
    $region35: #{tpu_custom_call.1} parent=1 // pred_check_branch
      %54 = sbr.rel (0) target = $region37
    $region36: #{tpu_custom_call.1} parent=1 // pred_region
      %55 = dma.done [#allocation6], 512
    $region37: #{tpu_custom_call.1} parent=1 // pred_fallthru
      _
    %v57 = vld [vmem:[%s1] sm:$0xf]
    %v58 = vld [vmem:[%s1 + $0x4] sm:$0xf]
    %v59 = vld [vmem:[%s1 + $0x8] sm:$0xf]
    %v60 = vld [vmem:[%s1 + $0xc] sm:$0xf]
    %v61 = vld [vmem:[%s1 + $0x10] sm:$0xf]
    %v62 = vld [vmem:[%s1 + $0x14] sm:$0xf]
    %v63 = vld [vmem:[%s1 + $0x18] sm:$0xf]
    %v64 = vld [vmem:[%s1 + $0x1c] sm:$0xf]
    %v65 = vld [vmem:[%s3] sm:$0xf]
    %v66 = vld [vmem:[%s3 + $0x4] sm:$0xf]
    %v75 = vunpack.c.l.b16 %v57
    %v76 = vunpack.c.l.b16 %v58
    %v77 = vunpack.c.l.b16 %v59
    %v78 = vunpack.c.l.b16 %v60
    %v79 = vunpack.c.l.b16 %v61
    %v80 = vunpack.c.l.b16 %v62
    %v81 = vunpack.c.l.b16 %v63
    %v82 = vunpack.c.l.b16 %v64
    %v83 = vpack.c.b16 %v76, %v75
    %v84 = vpack.c.b16 %v78, %v77
    %v85 = vpack.c.b16 %v80, %v79
    %v86 = vpack.c.b16 %v82, %v81
    %v89 = vunpack.c.l.b16 %v65
    %v90 = vunpack.c.l.b16 %v66
    %v91 = vpack.c.b16 %v90, %v89
    %vm93 = vcmask 130048
    %v95 = vsel %vm93, %v83, 0
    %v98 = vsel %vm93, %v84, 0
    %v101 = vsel %vm93, %v85, 0
    %v104 = vsel %vm93, %v86, 0
    %106 = vmatprep.subr.bf16.mxu0 0
    %107 = vmatpush1.bf16.msra.mxu0 %v91
    %108 = vmatprep.subr.bf16.mxu0 0
    %109 = vmatpush1.bf16.msra.mxu0 0
    %110 = vmatprep.subr.bf16.mxu0 0
    %111 = vmatpush1.bf16.msra.mxu0 0
    %112 = vmatprep.subr.bf16.mxu0 0
    %113 = vmatpush1.bf16.msra.mxu0 0
    %114 = vmatprep.subr.bf16.mxu0 0
    %115 = vmatpush1.bf16.msra.mxu0 0
    %116 = vmatprep.subr.bf16.mxu0 0
    %117 = vmatpush1.bf16.msra.mxu0 0
    %118 = vmatprep.subr.bf16.mxu0 0
    %119 = vmatpush1.bf16.msra.mxu0 0
    %120 = vmatprep.subr.bf16.mxu0 0
    %121 = vmatpush1.bf16.msra.mxu0 0
    %122 = vmatprep.subr.bf16.mxu0 0
    %123 = vmatpush1.bf16.msra.mxu0 0
    %124 = vmatprep.subr.bf16.mxu0 0
    %125 = vmatpush1.bf16.msra.mxu0 0
    %126 = vmatprep.subr.bf16.mxu0 0
    %127 = vmatpush1.bf16.msra.mxu0 0
    %128 = vmatprep.subr.bf16.mxu0 0
    %129 = vmatpush1.bf16.msra.mxu0 0
    %130 = vmatprep.subr.bf16.mxu0 0
    %131 = vmatpush1.bf16.msra.mxu0 0
    %132 = vmatprep.subr.bf16.mxu0 0
    %133 = vmatpush1.bf16.msra.mxu0 0
    %134 = vmatprep.subr.bf16.mxu0 0
    %135 = vmatpush1.bf16.msra.mxu0 0
    %136 = vmatprep.subr.bf16.mxu0 0
    %137 = vmatpush1.bf16.msra.mxu0 0
    %138 = vmatprep.mubr.bf16.mxu0 0
    %139 = vmatmul.mubr.bf16.gmra.mrb[0].mxu0 %v95
    %v140 = vpop.f32.mrb[0].mxu0
    %v141 = vadd.f32 0.0, %v140
    %v142 = vpop.f32.mrb[0].mxu0
    %v143 = vpop.f32.mrb[0].mxu0
    %v144 = vadd.f32 0.0, %v143
    %v145 = vpop.f32.mrb[0].mxu0
    %146 = vmatprep.mubr.bf16.mxu0 0
    %147 = vmatmul.mubr.bf16.gmra.mrb[0].mxu0 %v98
    %v148 = vpop.f32.mrb[0].mxu0
    %v149 = vadd.f32 0.0, %v148
    %v150 = vpop.f32.mrb[0].mxu0
    %v151 = vpop.f32.mrb[0].mxu0
    %v152 = vadd.f32 0.0, %v151
    %v153 = vpop.f32.mrb[0].mxu0
    %154 = vmatprep.mubr.bf16.mxu0 0
    %155 = vmatmul.mubr.bf16.gmra.mrb[0].mxu0 %v101
    %v156 = vpop.f32.mrb[0].mxu0
    %v157 = vadd.f32 0.0, %v156
    %v158 = vpop.f32.mrb[0].mxu0
    %v159 = vpop.f32.mrb[0].mxu0
    %v160 = vadd.f32 0.0, %v159
    %v161 = vpop.f32.mrb[0].mxu0
    %162 = vmatprep.mubr.bf16.mxu0 0
    %163 = vmatmul.mubr.bf16.gmra.mrb[0].mxu0 %v104
    %v164 = vpop.f32.mrb[0].mxu0
    %v165 = vadd.f32 0.0, %v164
    %v166 = vpop.f32.mrb[0].mxu0
    %v167 = vpop.f32.mrb[0].mxu0
    %v168 = vadd.f32 0.0, %v167
    %v169 = vpop.f32.mrb[0].mxu0
    %170 = vdwg.mxu0
    %v171 = vld [vmem:[#allocation2] sm:$0xf]
    %v172 = vld [vmem:[%s4] sm:$0xf]
    %v173 = vld [vmem:[%s4 + $0x4] sm:$0xf]
    %v174 = vld [vmem:[%s5] sm:$0x1]
    %v176 = vlaneseq
    %v177 = vshrl.u32 %v176, 7
    %v178 = vsub.s32 0, %v177
    %v179 = vrot.slane %v174, %v178
    %v183 = vunpack.c.l.b16 %v172
    %v184 = vunpack.c.l.b16 %v173
    %v185 = vpack.c.b16 %v184, %v183
    %v188 = vsel %vm93, %v171, 0
    %190 = vmatprep.subr.bf16.mxu0 0
    %191 = vmatpush1.bf16.msra.mxu0 %v185
    %192 = vmatprep.subr.bf16.mxu0 0
    %193 = vmatpush1.bf16.msra.mxu0 0
    %194 = vmatprep.subr.bf16.mxu0 0
    %195 = vmatpush1.bf16.msra.mxu0 0
    %196 = vmatprep.subr.bf16.mxu0 0
    %197 = vmatpush1.bf16.msra.mxu0 0
    %198 = vmatprep.subr.bf16.mxu0 0
    %199 = vmatpush1.bf16.msra.mxu0 0
    %200 = vmatprep.subr.bf16.mxu0 0
    %201 = vmatpush1.bf16.msra.mxu0 0
    %202 = vmatprep.subr.bf16.mxu0 0
    %203 = vmatpush1.bf16.msra.mxu0 0
    %204 = vmatprep.subr.bf16.mxu0 0
    %205 = vmatpush1.bf16.msra.mxu0 0
    %206 = vmatprep.subr.bf16.mxu0 0
    %207 = vmatpush1.bf16.msra.mxu0 0
    %208 = vmatprep.subr.bf16.mxu0 0
    %209 = vmatpush1.bf16.msra.mxu0 0
    %210 = vmatprep.subr.bf16.mxu0 0
    %211 = vmatpush1.bf16.msra.mxu0 0
    %212 = vmatprep.subr.bf16.mxu0 0
    %213 = vmatpush1.bf16.msra.mxu0 0
    %214 = vmatprep.subr.bf16.mxu0 0
    %215 = vmatpush1.bf16.msra.mxu0 0
    %216 = vmatprep.subr.bf16.mxu0 0
    %217 = vmatpush1.bf16.msra.mxu0 0
    %218 = vmatprep.subr.bf16.mxu0 0
    %219 = vmatpush1.bf16.msra.mxu0 0
    %220 = vmatprep.subr.bf16.mxu0 0
    %221 = vmatpush1.bf16.msra.mxu0 0
    %222 = vmatprep.mubr.bf16.mxu0 0
    %223 = vmatmul.mubr.bf16.gmra.mrb[0].mxu0 %v188
    %v224 = vpop.f32.mrb[0].mxu0
    %v225 = vadd.f32 %v179, %v224
    %v226 = vpop.f32.mrb[0].mxu0
    %v227 = vpop.f32.mrb[0].mxu0
    %v228 = vpop.f32.mrb[0].mxu0
    %229 = vdwg.mxu0
    %v231 = vcombine.high %v225, %v225
    %v233 = vunpack.c.l.s4 1966171168
    %v234 = vunpack.c.0.s8 %v233
    %v235 = vlaneseq
    %v236 = vshrl.u32 %v235, 7
    %v237 = vsub.s32 %v234, %v236
    %v238 = vrot.slane %v225, %v237
    %v240 = vunpack.c.l.s4 1966171168
    %v241 = vunpack.c.0.s8 %v240
    %v242 = vlaneseq
    %v243 = vshrl.u32 %v242, 7
    %v244 = vsub.s32 %v241, %v243
    %v245 = vrot.slane %v231, %v244
    %v246 = vcombine.high %v238, %v238
    %v247 = vcombine.high %v245, %v245
    %v249 = vunpack.c.l.s4 1966171168
    %v250 = vunpack.c.0.s8 %v249
    %v251 = vlaneseq
    %v252 = vshrl.u32 %v251, 7
    %v253 = vsub.s32 %v250, %v252
    %v254 = vrot.slane %v238, %v253
    %v256 = vunpack.c.l.s4 1966171168
    %v257 = vunpack.c.0.s8 %v256
    %v258 = vlaneseq
    %v259 = vshrl.u32 %v258, 7
    %v260 = vsub.s32 %v257, %v259
    %v261 = vrot.slane %v245, %v260
    %v263 = vunpack.c.l.s4 1966171168
    %v264 = vunpack.c.0.s8 %v263
    %v265 = vlaneseq
    %v266 = vshrl.u32 %v265, 7
    %v267 = vsub.s32 %v264, %v266
    %v268 = vrot.slane %v246, %v267
    %v270 = vunpack.c.l.s4 1966171168
    %v271 = vunpack.c.0.s8 %v270
    %v272 = vlaneseq
    %v273 = vshrl.u32 %v272, 7
    %v274 = vsub.s32 %v271, %v273
    %v275 = vrot.slane %v247, %v274
    %v276 = vcombine.high %v254, %v254
    %v277 = vcombine.high %v261, %v261
    %v278 = vcombine.high %v268, %v268
    %v279 = vcombine.high %v275, %v275
    %v280 = vlaneseq
    %v281 = vshrl.u32 %v280, 7
    %v282 = vsub.s32 0, %v281
    %v283 = vrot.slane %v254, %v282
    %v284 = vlaneseq
    %v285 = vshrl.u32 %v284, 7
    %v286 = vsub.s32 0, %v285
    %v287 = vrot.slane %v268, %v286
    %v288 = vlaneseq
    %v289 = vshrl.u32 %v288, 7
    %v290 = vsub.s32 0, %v289
    %v291 = vrot.slane %v276, %v290
    %v292 = vlaneseq
    %v293 = vshrl.u32 %v292, 7
    %v294 = vsub.s32 0, %v293
    %v295 = vrot.slane %v278, %v294
    %v296 = vlaneseq
    %v297 = vshrl.u32 %v296, 7
    %v298 = vsub.s32 0, %v297
    %v299 = vrot.slane %v261, %v298
    %v300 = vlaneseq
    %v301 = vshrl.u32 %v300, 7
    %v302 = vsub.s32 0, %v301
    %v303 = vrot.slane %v275, %v302
    %v304 = vlaneseq
    %v305 = vshrl.u32 %v304, 7
    %v306 = vsub.s32 0, %v305
    %v307 = vrot.slane %v277, %v306
    %v308 = vlaneseq
    %v309 = vshrl.u32 %v308, 7
    %v310 = vsub.s32 0, %v309
    %v311 = vrot.slane %v279, %v310
    %v320 = vadd.f32 %v141, %v283
    %v321 = vadd.f32 %v144, %v287
    %v322 = vadd.f32 %v149, %v291
    %v323 = vadd.f32 %v152, %v295
    %v324 = vadd.f32 %v157, %v299
    %v325 = vadd.f32 %v160, %v303
    %v326 = vadd.f32 %v165, %v307
    %v327 = vadd.f32 %v168, %v311
    %v328 = vmax.f32 %v320, 0.0
    %v329 = vmax.f32 %v321, 0.0
    %v330 = vmax.f32 %v322, 0.0
    %v331 = vmax.f32 %v323, 0.0
    %v332 = vmax.f32 %v324, 0.0
    %v333 = vmax.f32 %v325, 0.0
    %v334 = vmax.f32 %v326, 0.0
    %v335 = vmax.f32 %v327, 0.0
    %v336 = vld [vmem:[%s6] sm:$0xff]
    %v337 = vld [vmem:[%s6 + $0x8] sm:$0xff]
    %v338 = vld [vmem:[%s6 + $0x10] sm:$0xff]
    %v339 = vld [vmem:[%s6 + $0x18] sm:$0xff]
    %vm340 = vcmask 261120
    %v342 = vsel %vm340, %v328, 0
    %v345 = vsel %vm340, %v329, 0
    %v348 = vsel %vm340, %v330, 0
    %v351 = vsel %vm340, %v331, 0
    %v354 = vsel %vm340, %v332, 0
    %v357 = vsel %vm340, %v333, 0
    %v360 = vsel %vm340, %v334, 0
    %v363 = vsel %vm340, %v335, 0
    %365 = vmatprep.subr.mxu0 0.0
    %366 = vmatpush1.msra.mxu0 %v336
    %367 = vmatprep.subr.mxu0 0.0
    %368 = vmatpush1.msra.mxu0 %v337
    %369 = vmatprep.subr.mxu0 0.0
    %370 = vmatpush1.msra.mxu0 %v338
    %371 = vmatprep.subr.mxu0 0.0
    %372 = vmatpush1.msra.mxu0 %v339
    %373 = vmatprep.subr.mxu0 0.0
    %374 = vmatpush1.msra.mxu0 0.0
    %375 = vmatprep.subr.mxu0 0.0
    %376 = vmatpush1.msra.mxu0 0.0
    %377 = vmatprep.subr.mxu0 0.0
    %378 = vmatpush1.msra.mxu0 0.0
    %379 = vmatprep.subr.mxu0 0.0
    %380 = vmatpush1.msra.mxu0 0.0
    %381 = vmatprep.subr.mxu0 0.0
    %382 = vmatpush1.msra.mxu0 0.0
    %383 = vmatprep.subr.mxu0 0.0
    %384 = vmatpush1.msra.mxu0 0.0
    %385 = vmatprep.subr.mxu0 0.0
    %386 = vmatpush1.msra.mxu0 0.0
    %387 = vmatprep.subr.mxu0 0.0
    %388 = vmatpush1.msra.mxu0 0.0
    %389 = vmatprep.subr.mxu0 0.0
    %390 = vmatpush1.msra.mxu0 0.0
    %391 = vmatprep.subr.mxu0 0.0
    %392 = vmatpush1.msra.mxu0 0.0
    %393 = vmatprep.subr.mxu0 0.0
    %394 = vmatpush1.msra.mxu0 0.0
    %395 = vmatprep.subr.mxu0 0.0
    %396 = vmatpush1.msra.mxu0 0.0
    %397 = vmatprep.subr.mxu0 0.0
    %398 = vmatpush1.msra.mxu0 0.0
    %399 = vmatprep.subr.mxu0 0.0
    %400 = vmatpush1.msra.mxu0 0.0
    %401 = vmatprep.subr.mxu0 0.0
    %402 = vmatpush1.msra.mxu0 0.0
    %403 = vmatprep.subr.mxu0 0.0
    %404 = vmatpush1.msra.mxu0 0.0
    %405 = vmatprep.subr.mxu0 0.0
    %406 = vmatpush1.msra.mxu0 0.0
    %407 = vmatprep.subr.mxu0 0.0
    %408 = vmatpush1.msra.mxu0 0.0
    %409 = vmatprep.subr.mxu0 0.0
    %410 = vmatpush1.msra.mxu0 0.0
    %411 = vmatprep.subr.mxu0 0.0
    %412 = vmatpush1.msra.mxu0 0.0
    %413 = vmatprep.subr.mxu0 0.0
    %414 = vmatpush1.msra.mxu0 0.0
    %415 = vmatprep.subr.mxu0 0.0
    %416 = vmatpush1.msra.mxu0 0.0
    %417 = vmatprep.subr.mxu0 0.0
    %418 = vmatpush1.msra.mxu0 0.0
    %419 = vmatprep.subr.mxu0 0.0
    %420 = vmatpush1.msra.mxu0 0.0
    %421 = vmatprep.subr.mxu0 0.0
    %422 = vmatpush1.msra.mxu0 0.0
    %423 = vmatprep.subr.mxu0 0.0
    %424 = vmatpush1.msra.mxu0 0.0
    %425 = vmatprep.subr.mxu0 0.0
    %426 = vmatpush1.msra.mxu0 0.0
    %427 = vmatprep.subr.mxu0 0.0
    %428 = vmatpush1.msra.mxu0 0.0
    %429 = vmatprep.mubr.f32.mxu0 0.0
    %430 = vmatmul.mubr.f32.gmra.mrb[0].mxu0 %v342
    %v431 = vpop.f32.mrb[0].mxu0
    %v432 = vadd.f32 0.0, %v431
    %v433 = vpop.f32.mrb[0].mxu0
    %434 = vmatprep.mubr.f32.mxu0 0.0
    %435 = vmatmul.mubr.f32.gmra.mrb[0].mxu0 %v345
    %v436 = vpop.f32.mrb[0].mxu0
    %v437 = vadd.f32 0.0, %v436
    %v438 = vpop.f32.mrb[0].mxu0
    %439 = vmatprep.mubr.f32.mxu0 0.0
    %440 = vmatmul.mubr.f32.gmra.mrb[0].mxu0 %v348
    %v441 = vpop.f32.mrb[0].mxu0
    %v442 = vadd.f32 0.0, %v441
    %v443 = vpop.f32.mrb[0].mxu0
    %444 = vmatprep.mubr.f32.mxu0 0.0
    %445 = vmatmul.mubr.f32.gmra.mrb[0].mxu0 %v351
    %v446 = vpop.f32.mrb[0].mxu0
    %v447 = vadd.f32 0.0, %v446
    %v448 = vpop.f32.mrb[0].mxu0
    %449 = vmatprep.mubr.f32.mxu0 0.0
    %450 = vmatmul.mubr.f32.gmra.mrb[0].mxu0 %v354
    %v451 = vpop.f32.mrb[0].mxu0
    %v452 = vadd.f32 0.0, %v451
    %v453 = vpop.f32.mrb[0].mxu0
    %454 = vmatprep.mubr.f32.mxu0 0.0
    %455 = vmatmul.mubr.f32.gmra.mrb[0].mxu0 %v357
    %v456 = vpop.f32.mrb[0].mxu0
    %v457 = vadd.f32 0.0, %v456
    %v458 = vpop.f32.mrb[0].mxu0
    %459 = vmatprep.mubr.f32.mxu0 0.0
    %460 = vmatmul.mubr.f32.gmra.mrb[0].mxu0 %v360
    %v461 = vpop.f32.mrb[0].mxu0
    %v462 = vadd.f32 0.0, %v461
    %v463 = vpop.f32.mrb[0].mxu0
    %464 = vmatprep.mubr.f32.mxu0 0.0
    %465 = vmatmul.mubr.f32.gmra.mrb[0].mxu0 %v363
    %v466 = vpop.f32.mrb[0].mxu0
    %v467 = vadd.f32 0.0, %v466
    %v468 = vpop.f32.mrb[0].mxu0
    %469 = vdwg.mxu0
    %478 = vset.pattern.permute.xlu0 0
    %479 = vperm.xlu0 %478, %v432
    %v480 = vpop.permute.xlu0 %479
    %481 = vset.pattern.permute.xlu0 0
    %482 = vperm.xlu0 %481, %v437
    %v483 = vpop.permute.xlu0 %482
    %484 = vset.pattern.permute.xlu0 0
    %485 = vperm.xlu0 %484, %v442
    %v486 = vpop.permute.xlu0 %485
    %487 = vset.pattern.permute.xlu0 0
    %488 = vperm.xlu0 %487, %v447
    %v489 = vpop.permute.xlu0 %488
    %490 = vset.pattern.permute.xlu0 0
    %491 = vperm.xlu0 %490, %v452
    %v492 = vpop.permute.xlu0 %491
    %493 = vset.pattern.permute.xlu0 0
    %494 = vperm.xlu0 %493, %v457
    %v495 = vpop.permute.xlu0 %494
    %496 = vset.pattern.permute.xlu0 0
    %497 = vperm.xlu0 %496, %v462
    %v498 = vpop.permute.xlu0 %497
    %499 = vset.pattern.permute.xlu0 0
    %500 = vperm.xlu0 %499, %v467
    %v501 = vpop.permute.xlu0 %500
    %v502 = vlaneseq
    %v503 = vand.u32 %v502, 127
    %v504 = vlaneseq
    %v505 = vshrl.u32 %v504, 7
    %v506 = vsub.s32 %v503, %v505
    %v507 = vrot.slane %v480, %v506
    %v508 = vlaneseq
    %v509 = vshrl.u32 %v508, 7
    %v510 = vsub.s32 %v503, %v509
    %v511 = vrot.slane %v483, %v510
    %v512 = vlaneseq
    %v513 = vshrl.u32 %v512, 7
    %v514 = vsub.s32 %v503, %v513
    %v515 = vrot.slane %v486, %v514
    %v516 = vlaneseq
    %v517 = vshrl.u32 %v516, 7
    %v518 = vsub.s32 %v503, %v517
    %v519 = vrot.slane %v489, %v518
    %v520 = vlaneseq
    %v521 = vshrl.u32 %v520, 7
    %v522 = vsub.s32 %v503, %v521
    %v523 = vrot.slane %v492, %v522
    %v524 = vlaneseq
    %v525 = vshrl.u32 %v524, 7
    %v526 = vsub.s32 %v503, %v525
    %v527 = vrot.slane %v495, %v526
    %v528 = vlaneseq
    %v529 = vshrl.u32 %v528, 7
    %v530 = vsub.s32 %v503, %v529
    %v531 = vrot.slane %v498, %v530
    %v532 = vlaneseq
    %v533 = vshrl.u32 %v532, 7
    %v534 = vsub.s32 %v503, %v533
    %v535 = vrot.slane %v501, %v534
    %vm536 = vcmask 1041409
    %v537 = vsel %vm536, %v511, %v507
    %vm538 = vcmask 1042434
    %v539 = vsel %vm538, %v515, %v537
    %vm540 = vcmask 1043459
    %v541 = vsel %vm540, %v519, %v539
    %vm542 = vcmask 1044484
    %v543 = vsel %vm542, %v523, %v541
    %vm544 = vcmask 1045509
    %v545 = vsel %vm544, %v527, %v543
    %vm546 = vcmask 1046534
    %v547 = vsel %vm546, %v531, %v545
    %vm548 = vcmask 1047559
    %v549 = vsel %vm548, %v535, %v547
    %vm551 = vcmask 64512
    %v552 = vsel %vm551, %v549, -inf
    %553 = vmax.xlane.f32.xlu0 %v552
    %v554 = vpop.xlane.xlu0 %553
    %v556 = vlaneseq
    %v557 = vshrl.u32 %v556, 7
    %v558 = vsub.s32 0, %v557
    %v559 = vrot.slane %v554, %v558
    %v560 = vlaneseq
    %v561 = vshrl.u32 %v560, 7
    %v562 = vsub.s32 1, %v561
    %v563 = vrot.slane %v554, %v562
    %v564 = vlaneseq
    %v565 = vshrl.u32 %v564, 7
    %v566 = vsub.s32 2, %v565
    %v567 = vrot.slane %v554, %v566
    %v568 = vlaneseq
    %v569 = vshrl.u32 %v568, 7
    %v570 = vsub.s32 3, %v569
    %v571 = vrot.slane %v554, %v570
    %v572 = vlaneseq
    %v573 = vshrl.u32 %v572, 7
    %v574 = vsub.s32 4, %v573
    %v575 = vrot.slane %v554, %v574
    %v576 = vlaneseq
    %v577 = vshrl.u32 %v576, 7
    %v578 = vsub.s32 5, %v577
    %v579 = vrot.slane %v554, %v578
    %v580 = vlaneseq
    %v581 = vshrl.u32 %v580, 7
    %v582 = vsub.s32 6, %v581
    %v583 = vrot.slane %v554, %v582
    %v584 = vlaneseq
    %v585 = vshrl.u32 %v584, 7
    %v586 = vsub.s32 7, %v585
    %v587 = vrot.slane %v554, %v586
    %v596 = vsub.f32 %v432, %v559
    %v597 = vsub.f32 %v437, %v563
    %v598 = vsub.f32 %v442, %v567
    %v599 = vsub.f32 %v447, %v571
    %v600 = vsub.f32 %v452, %v575
    %v601 = vsub.f32 %v457, %v579
    %v602 = vsub.f32 %v462, %v583
    %v603 = vsub.f32 %v467, %v587
    %v604 = vmul.f32 %v596, 1.442695
    %v605 = vpow.pop %v604
    %v606 = vmul.f32 %v597, 1.442695
    %v607 = vpow.pop %v606
    %v608 = vmul.f32 %v598, 1.442695
    %v609 = vpow.pop %v608
    %v610 = vmul.f32 %v599, 1.442695
    %v611 = vpow.pop %v610
    %v612 = vmul.f32 %v600, 1.442695
    %v613 = vpow.pop %v612
    %v614 = vmul.f32 %v601, 1.442695
    %v615 = vpow.pop %v614
    %v616 = vmul.f32 %v602, 1.442695
    %v617 = vpow.pop %v616
    %v618 = vmul.f32 %v603, 1.442695
    %v619 = vpow.pop %v618
    %628 = vset.pattern.permute.xlu0 0
    %629 = vperm.xlu0 %628, %v605
    %v630 = vpop.permute.xlu0 %629
    %631 = vset.pattern.permute.xlu0 0
    %632 = vperm.xlu0 %631, %v607
    %v633 = vpop.permute.xlu0 %632
    %634 = vset.pattern.permute.xlu0 0
    %635 = vperm.xlu0 %634, %v609
    %v636 = vpop.permute.xlu0 %635
    %637 = vset.pattern.permute.xlu0 0
    %638 = vperm.xlu0 %637, %v611
    %v639 = vpop.permute.xlu0 %638
    %640 = vset.pattern.permute.xlu0 0
    %641 = vperm.xlu0 %640, %v613
    %v642 = vpop.permute.xlu0 %641
    %643 = vset.pattern.permute.xlu0 0
    %644 = vperm.xlu0 %643, %v615
    %v645 = vpop.permute.xlu0 %644
    %646 = vset.pattern.permute.xlu0 0
    %647 = vperm.xlu0 %646, %v617
    %v648 = vpop.permute.xlu0 %647
    %649 = vset.pattern.permute.xlu0 0
    %650 = vperm.xlu0 %649, %v619
    %v651 = vpop.permute.xlu0 %650
    %v652 = vlaneseq
    %v653 = vshrl.u32 %v652, 7
    %v654 = vsub.s32 %v503, %v653
    %v655 = vrot.slane %v630, %v654
    %v656 = vlaneseq
    %v657 = vshrl.u32 %v656, 7
    %v658 = vsub.s32 %v503, %v657
    %v659 = vrot.slane %v633, %v658
    %v660 = vlaneseq
    %v661 = vshrl.u32 %v660, 7
    %v662 = vsub.s32 %v503, %v661
    %v663 = vrot.slane %v636, %v662
    %v664 = vlaneseq
    %v665 = vshrl.u32 %v664, 7
    %v666 = vsub.s32 %v503, %v665
    %v667 = vrot.slane %v639, %v666
    %v668 = vlaneseq
    %v669 = vshrl.u32 %v668, 7
    %v670 = vsub.s32 %v503, %v669
    %v671 = vrot.slane %v642, %v670
    %v672 = vlaneseq
    %v673 = vshrl.u32 %v672, 7
    %v674 = vsub.s32 %v503, %v673
    %v675 = vrot.slane %v645, %v674
    %v676 = vlaneseq
    %v677 = vshrl.u32 %v676, 7
    %v678 = vsub.s32 %v503, %v677
    %v679 = vrot.slane %v648, %v678
    %v680 = vlaneseq
    %v681 = vshrl.u32 %v680, 7
    %v682 = vsub.s32 %v503, %v681
    %v683 = vrot.slane %v651, %v682
    %v684 = vsel %vm536, %v659, %v655
    %v685 = vsel %vm538, %v663, %v684
    %v686 = vsel %vm540, %v667, %v685
    %v687 = vsel %vm542, %v671, %v686
    %v688 = vsel %vm544, %v675, %v687
    %v689 = vsel %vm546, %v679, %v688
    %v690 = vsel %vm548, %v683, %v689
    %v692 = vsel %vm551, %v690, 0.0
    %693 = vadd.xlane.f32.xlu0 %v692
    %v694 = vpop.xlane.xlu0 %693
    %v695 = vrcp.pop %v694
    %v697 = vlaneseq
    %v698 = vshrl.u32 %v697, 7
    %v699 = vsub.s32 0, %v698
    %v700 = vrot.slane %v695, %v699
    %v701 = vlaneseq
    %v702 = vshrl.u32 %v701, 7
    %v703 = vsub.s32 1, %v702
    %v704 = vrot.slane %v695, %v703
    %v705 = vlaneseq
    %v706 = vshrl.u32 %v705, 7
    %v707 = vsub.s32 2, %v706
    %v708 = vrot.slane %v695, %v707
    %v709 = vlaneseq
    %v710 = vshrl.u32 %v709, 7
    %v711 = vsub.s32 3, %v710
    %v712 = vrot.slane %v695, %v711
    %v713 = vlaneseq
    %v714 = vshrl.u32 %v713, 7
    %v715 = vsub.s32 4, %v714
    %v716 = vrot.slane %v695, %v715
    %v717 = vlaneseq
    %v718 = vshrl.u32 %v717, 7
    %v719 = vsub.s32 5, %v718
    %v720 = vrot.slane %v695, %v719
    %v721 = vlaneseq
    %v722 = vshrl.u32 %v721, 7
    %v723 = vsub.s32 6, %v722
    %v724 = vrot.slane %v695, %v723
    %v725 = vlaneseq
    %v726 = vshrl.u32 %v725, 7
    %v727 = vsub.s32 7, %v726
    %v728 = vrot.slane %v695, %v727
    %v737 = vmul.f32 %v605, %v700
    %v738 = vmul.f32 %v607, %v704
    %v739 = vmul.f32 %v609, %v708
    %v740 = vmul.f32 %v611, %v712
    %v741 = vmul.f32 %v613, %v716
    %v742 = vmul.f32 %v615, %v720
    %v743 = vmul.f32 %v617, %v724
    %v744 = vmul.f32 %v619, %v728
    %753 = vset.pattern.permute.xlu0 0
    %754 = vperm.xlu0 %753, %v737
    %v755 = vpop.permute.xlu0 %754
    %756 = vset.pattern.permute.xlu0 0
    %757 = vperm.xlu0 %756, %v738
    %v758 = vpop.permute.xlu0 %757
    %759 = vset.pattern.permute.xlu0 0
    %760 = vperm.xlu0 %759, %v739
    %v761 = vpop.permute.xlu0 %760
    %762 = vset.pattern.permute.xlu0 0
    %763 = vperm.xlu0 %762, %v740
    %v764 = vpop.permute.xlu0 %763
    %765 = vset.pattern.permute.xlu0 0
    %766 = vperm.xlu0 %765, %v741
    %v767 = vpop.permute.xlu0 %766
    %768 = vset.pattern.permute.xlu0 0
    %769 = vperm.xlu0 %768, %v742
    %v770 = vpop.permute.xlu0 %769
    %771 = vset.pattern.permute.xlu0 0
    %772 = vperm.xlu0 %771, %v743
    %v773 = vpop.permute.xlu0 %772
    %774 = vset.pattern.permute.xlu0 0
    %775 = vperm.xlu0 %774, %v744
    %v776 = vpop.permute.xlu0 %775
    %v777 = vlaneseq
    %v778 = vshrl.u32 %v777, 7
    %v779 = vsub.s32 %v503, %v778
    %v780 = vrot.slane %v755, %v779
    %v781 = vlaneseq
    %v782 = vshrl.u32 %v781, 7
    %v783 = vsub.s32 %v503, %v782
    %v784 = vrot.slane %v758, %v783
    %v785 = vlaneseq
    %v786 = vshrl.u32 %v785, 7
    %v787 = vsub.s32 %v503, %v786
    %v788 = vrot.slane %v761, %v787
    %v789 = vlaneseq
    %v790 = vshrl.u32 %v789, 7
    %v791 = vsub.s32 %v503, %v790
    %v792 = vrot.slane %v764, %v791
    %v793 = vlaneseq
    %v794 = vshrl.u32 %v793, 7
    %v795 = vsub.s32 %v503, %v794
    %v796 = vrot.slane %v767, %v795
    %v797 = vlaneseq
    %v798 = vshrl.u32 %v797, 7
    %v799 = vsub.s32 %v503, %v798
    %v800 = vrot.slane %v770, %v799
    %v801 = vlaneseq
    %v802 = vshrl.u32 %v801, 7
    %v803 = vsub.s32 %v503, %v802
    %v804 = vrot.slane %v773, %v803
    %v805 = vlaneseq
    %v806 = vshrl.u32 %v805, 7
    %v807 = vsub.s32 %v503, %v806
    %v808 = vrot.slane %v776, %v807
    %v809 = vsel %vm536, %v784, %v780
    %v810 = vsel %vm538, %v788, %v809
    %v811 = vsel %vm540, %v792, %v810
    %v812 = vsel %vm542, %v796, %v811
    %v813 = vsel %vm544, %v800, %v812
    %v814 = vsel %vm546, %v804, %v813
    %v815 = vsel %vm548, %v808, %v814
    %817 = vst.msk [vmem:[#allocation8] sm:$0xff] %vm551, %v815
    %v818 = vld [vmem:[#allocation5] sm:$0xf]
    %v819 = vld [vmem:[#allocation5 + $0x4] sm:$0xf]
    %v820 = vld [vmem:[#allocation5 + $0x8] sm:$0xf]
    %v821 = vld [vmem:[#allocation5 + $0xc] sm:$0xf]
    %v822 = vld [vmem:[#allocation5 + $0x10] sm:$0xf]
    %v823 = vld [vmem:[#allocation5 + $0x14] sm:$0xf]
    %v824 = vld [vmem:[#allocation5 + $0x18] sm:$0xf]
    %v825 = vld [vmem:[#allocation5 + $0x1c] sm:$0xf]
    %v826 = vunpack.c.l.bf16 %v818
    %v827 = vunpack.c.l.bf16 %v819
    %v828 = vunpack.c.l.bf16 %v820
    %v829 = vunpack.c.l.bf16 %v821
    %v830 = vunpack.c.l.bf16 %v822
    %v831 = vunpack.c.l.bf16 %v823
    %v832 = vunpack.c.l.bf16 %v824
    %v833 = vunpack.c.l.bf16 %v825
    %v842 = vmul.f32 %v755, %v826
    %v843 = vmul.f32 %v758, %v827
    %v844 = vmul.f32 %v761, %v828
    %v845 = vmul.f32 %v764, %v829
    %v846 = vmul.f32 %v767, %v830
    %v847 = vmul.f32 %v770, %v831
    %v848 = vmul.f32 %v773, %v832
    %v849 = vmul.f32 %v776, %v833
    %v850 = vsel %vm93, %v842, 0.0
    %v851 = vrot.slane %v850, 4
    %v852 = vadd.f32 %v850, %v851
    %v853 = vrot.slane %v852, 2
    %v854 = vadd.f32 %v852, %v853
    %v855 = vrot.slane %v854, 1
    %v856 = vadd.f32 %v854, %v855
    %v857 = vsel %vm93, %v843, 0.0
    %v858 = vrot.slane %v857, 4
    %v859 = vadd.f32 %v857, %v858
    %v860 = vrot.slane %v859, 2
    %v861 = vadd.f32 %v859, %v860
    %v862 = vrot.slane %v861, 1
    %v863 = vadd.f32 %v861, %v862
    %v864 = vsel %vm93, %v844, 0.0
    %v865 = vrot.slane %v864, 4
    %v866 = vadd.f32 %v864, %v865
    %v867 = vrot.slane %v866, 2
    %v868 = vadd.f32 %v866, %v867
    %v869 = vrot.slane %v868, 1
    %v870 = vadd.f32 %v868, %v869
    %v871 = vsel %vm93, %v845, 0.0
    %v872 = vrot.slane %v871, 4
    %v873 = vadd.f32 %v871, %v872
    %v874 = vrot.slane %v873, 2
    %v875 = vadd.f32 %v873, %v874
    %v876 = vrot.slane %v875, 1
    %v877 = vadd.f32 %v875, %v876
    %v878 = vsel %vm93, %v846, 0.0
    %v879 = vrot.slane %v878, 4
    %v880 = vadd.f32 %v878, %v879
    %v881 = vrot.slane %v880, 2
    %v882 = vadd.f32 %v880, %v881
    %v883 = vrot.slane %v882, 1
    %v884 = vadd.f32 %v882, %v883
    %v885 = vsel %vm93, %v847, 0.0
    %v886 = vrot.slane %v885, 4
    %v887 = vadd.f32 %v885, %v886
    %v888 = vrot.slane %v887, 2
    %v889 = vadd.f32 %v887, %v888
    %v890 = vrot.slane %v889, 1
    %v891 = vadd.f32 %v889, %v890
    %v892 = vsel %vm93, %v848, 0.0
    %v893 = vrot.slane %v892, 4
    %v894 = vadd.f32 %v892, %v893
    %v895 = vrot.slane %v894, 2
    %v896 = vadd.f32 %v894, %v895
    %v897 = vrot.slane %v896, 1
    %v898 = vadd.f32 %v896, %v897
    %v899 = vsel %vm93, %v849, 0.0
    %v900 = vrot.slane %v899, 4
    %v901 = vadd.f32 %v899, %v900
    %v902 = vrot.slane %v901, 2
    %v903 = vadd.f32 %v901, %v902
    %v904 = vrot.slane %v903, 1
    %v905 = vadd.f32 %v903, %v904
    %v914 = vsel %vm536, %v863, %v856
    %v915 = vsel %vm538, %v870, %v914
    %v916 = vsel %vm540, %v877, %v915
    %v917 = vsel %vm542, %v884, %v916
    %v918 = vsel %vm544, %v891, %v917
    %v919 = vsel %vm546, %v898, %v918
    %v920 = vsel %vm548, %v905, %v919
    %922 = vst.msk [vmem:[#allocation7] sm:$0xff] %vm93, %v920
    // Predicated region
    $region38: #{tpu_custom_call.1} parent=1 // pred_check
      _
    $region39: #{tpu_custom_call.1} parent=1 // pred_check_branch
      %924 = sbr.rel (0) target = $region41
    $region40: #{tpu_custom_call.1} parent=1 // pred_region
      %s926 = ssub.s32 128, 128
      %927 = vsyncadd [#allocation4], %s926
      %s929 = sshll.u32 [#allocation7], 4
      %s930 = int_to_ptr.vmem [resolvable:$true] %s929
      %932 = dma.vmem_to_hbm [thread:$0]  %s930, 128, %s7, [#allocation4]
    $region41: #{tpu_custom_call.1} parent=1 // pred_fallthru
      _
    // Predicated region
    $region42: #{tpu_custom_call.1} parent=1 // pred_check
      _
    $region43: #{tpu_custom_call.1} parent=1 // pred_check_branch
      %934 = sbr.rel (0) target = $region45
    $region44: #{tpu_custom_call.1} parent=1 // pred_region
      %s936 = ssub.s32 128, 128
      %937 = vsyncadd [#allocation9], %s936
      %s939 = sshll.u32 [#allocation8], 4
      %s940 = int_to_ptr.vmem [resolvable:$true] %s939
      %942 = dma.vmem_to_hbm [thread:$0]  %s940, 128, %s8, [#allocation9]
    $region45: #{tpu_custom_call.1} parent=1 // pred_fallthru
      _
    // Predicated region
    $region46: #{tpu_custom_call.1} parent=1 // pred_check
      _
    $region47: #{tpu_custom_call.1} parent=1 // pred_check_branch
      %944 = sbr.rel (0) target = $region49
    $region48: #{tpu_custom_call.1} parent=1 // pred_region
      %945 = dma.done [#allocation4], 128
    $region49: #{tpu_custom_call.1} parent=1 // pred_fallthru
      _
    // Predicated region
    $region50: #{tpu_custom_call.1} parent=1 // pred_check
      _
    $region51: #{tpu_custom_call.1} parent=1 // pred_check_branch
      %947 = sbr.rel (0) target = $region53
    $region52: #{tpu_custom_call.1} parent=1 // pred_region
      %948 = dma.done [#allocation9], 128
    $region53: #{tpu_custom_call.1} parent=1 // pred_fallthru
      _
    %949 = vsyncpa [#allocation3], 1
    %950 = vsyncpa [#allocation6], 1
    %951 = vsyncpa [#allocation4], 1
    %952 = vsyncpa [#allocation9], 1

// kernel: tpu_custom_call.1
$region0: #{tpu_custom_call.1}
  #allocation0 [shape = 'u32[]', space=smem, size = 0x4, offset = 0x4, fixed_abs, tag = 'smem constant byte address 0x4 - core index']
  #allocation1 [shape = 'u32[144,128]{1,0:T(1,128)}', space=vmem, size = 0x12000, scoped, tag = 'internal scratch']
  %s0 = inlined_call_operand.hbm [shape: bf16[8,16], index: 0, kind: input, shape index: {}]
  %s1 = inlined_call_operand.vmem [shape: bf16[8,8,16], index: 1, kind: input, shape index: {}]
  %s2 = inlined_call_operand.hbm [shape: bf16[8,8,16], index: 2, kind: input, shape index: {}]
  %s3 = inlined_call_operand.vmem [shape: bf16[16,32], index: 3, kind: input, shape index: {}]
  %s4 = inlined_call_operand.vmem [shape: bf16[16,32], index: 4, kind: input, shape index: {}]
  %s5 = inlined_call_operand.vmem [shape: f32[1,32], index: 5, kind: input, shape index: {}]
  %s6 = inlined_call_operand.vmem [shape: f32[32,1], index: 6, kind: input, shape index: {}]
  %s7 = inlined_call_operand.hbm [shape: f32[8,16], index: 7, kind: output, shape index: {0}]
  %s8 = inlined_call_operand.hbm [shape: f32[8,8], index: 8, kind: output, shape index: {1}]
  %9 = xla_tuple %s7, %s8
  %s10 = sld [smem:[#allocation0]]
  $region54: #{tpu_custom_call.1} parent=0
    _
  %s12 = ssub.s32 1, %s10
  %s13 = scalar_select 0, %s12, %s10
  $region1: #{tpu_custom_call.1} parent=0
    #allocation2 [shape = 'u8[2048]{0}', space=vmem, size = 0x800, scoped, tag = 'input window, operand 0, single buffered']
    #allocation3 [shape = 's32[1]{0}', space=sflag, size = 0x4, scoped, tag = 'scoped memory for tpu_custom_call.1']
    #allocation4 [shape = 's32[1]{0}', space=sflag, size = 0x4, scoped, tag = 'scoped memory for tpu_custom_call.1']
    #allocation5 [shape = 'u8[16384]{0}', space=vmem, size = 0x4000, scoped, tag = 'input window, operand 2, single buffered']
    #allocation6 [shape = 's32[1]{0}', space=sflag, size = 0x4, scoped, tag = 'scoped memory for tpu_custom_call.1']
    #allocation7 [shape = 'u8[4096]{0}', space=vmem, size = 0x1000, scoped, tag = 'output window, operand 0, single buffered']
    #allocation8 [shape = 'u8[4096]{0}', space=vmem, size = 0x1000, scoped, tag = 'output window, operand 1, single buffered']
    #allocation9 [shape = 's32[1]{0}', space=sflag, size = 0x4, scoped, tag = 'scoped memory for tpu_custom_call.1']
    %14 = vsyncpa [#allocation3], 0
    %15 = vsyncpa [#allocation6], 0
    %16 = vsyncpa [#allocation4], 0
    %17 = vsyncpa [#allocation9], 0
    // Predicated region
    $region2: #{tpu_custom_call.1} parent=1 // pred_check
      _
    $region3: #{tpu_custom_call.1} parent=1 // pred_check_branch
      %19 = sbr.rel (0) target = $region5
    $region4: #{tpu_custom_call.1} parent=1 // pred_region
      %s21 = ssub.s32 64, 64
      %22 = vsyncadd [#allocation3], %s21
      %s24 = sshll.u32 [#allocation2], 4
      %s25 = int_to_ptr.vmem [resolvable:$true] %s24
      %27 = dma.hbm_to_vmem [thread:$0]  %s0, 64, %s25, [#allocation3]
    $region5: #{tpu_custom_call.1} parent=1 // pred_fallthru
      _
    // Predicated region
    $region6: #{tpu_custom_call.1} parent=1 // pred_check
      _
    $region7: #{tpu_custom_call.1} parent=1 // pred_check_branch
      %29 = sbr.rel (0) target = $region9
    $region8: #{tpu_custom_call.1} parent=1 // pred_region
      _
    $region9: #{tpu_custom_call.1} parent=1 // pred_fallthru
      _
    // Predicated region
    $region10: #{tpu_custom_call.1} parent=1 // pred_check
      _
    $region11: #{tpu_custom_call.1} parent=1 // pred_check_branch
      %31 = sbr.rel (0) target = $region13
    $region12: #{tpu_custom_call.1} parent=1 // pred_region
      %s33 = ssub.s32 512, 512
      %34 = vsyncadd [#allocation6], %s33
      %s35 = sshll.u32 [#allocation5], 4
      %s36 = int_to_ptr.vmem [resolvable:$true] %s35
      %41 = dma.hbm_to_vmem [thread:$0]  %s2, 512, %s36, [#allocation6], 64, 64, 4
    $region13: #{tpu_custom_call.1} parent=1 // pred_fallthru
      _
    // Predicated region
    $region14: #{tpu_custom_call.1} parent=1 // pred_check
      _
    $region15: #{tpu_custom_call.1} parent=1 // pred_check_branch
      %43 = sbr.rel (0) target = $region17
    $region16: #{tpu_custom_call.1} parent=1 // pred_region
      _
    $region17: #{tpu_custom_call.1} parent=1 // pred_fallthru
      _
    // Predicated region
    $region18: #{tpu_custom_call.1} parent=1 // pred_check
      _
    $region19: #{tpu_custom_call.1} parent=1 // pred_check_branch
      %45 = sbr.rel (0) target = $region21
    $region20: #{tpu_custom_call.1} parent=1 // pred_region
      _
    $region21: #{tpu_custom_call.1} parent=1 // pred_fallthru
      _
    // Predicated region
    $region22: #{tpu_custom_call.1} parent=1 // pred_check
      _
    $region23: #{tpu_custom_call.1} parent=1 // pred_check_branch
      %47 = sbr.rel (0) target = $region25
    $region24: #{tpu_custom_call.1} parent=1 // pred_region
      _
    $region25: #{tpu_custom_call.1} parent=1 // pred_fallthru
      _
    // Predicated region
    $region26: #{tpu_custom_call.1} parent=1 // pred_check
      _
    $region27: #{tpu_custom_call.1} parent=1 // pred_check_branch
      %49 = sbr.rel (0) target = $region29
    $region28: #{tpu_custom_call.1} parent=1 // pred_region
      _
    $region29: #{tpu_custom_call.1} parent=1 // pred_fallthru
      _
    // Predicated region
    $region30: #{tpu_custom_call.1} parent=1 // pred_check
      _
    $region31: #{tpu_custom_call.1} parent=1 // pred_check_branch
      %51 = sbr.rel (0) target = $region33
    $region32: #{tpu_custom_call.1} parent=1 // pred_region
      %52 = dma.done [#allocation3], 64
    $region33: #{tpu_custom_call.1} parent=1 // pred_fallthru
      _
    // Predicated region
    $region34: #{tpu_custom_call.1} parent=1 // pred_check
      _
    $region35: #{tpu_custom_call.1} parent=1 // pred_check_branch
      %54 = sbr.rel (0) target = $region37
    $region36: #{tpu_custom_call.1} parent=1 // pred_region
      %55 = dma.done [#allocation6], 512
    $region37: #{tpu_custom_call.1} parent=1 // pred_fallthru
      _
    %v57 = vld [vmem:[%s1] sm:$0xf]
    %v58 = vld [vmem:[%s1 + $0x4] sm:$0xf]
    %v59 = vld [vmem:[%s1 + $0x8] sm:$0xf]
    %v60 = vld [vmem:[%s1 + $0xc] sm:$0xf]
    %v61 = vld [vmem:[%s1 + $0x10] sm:$0xf]
    %v62 = vld [vmem:[%s1 + $0x14] sm:$0xf]
    %v63 = vld [vmem:[%s1 + $0x18] sm:$0xf]
    %v64 = vld [vmem:[%s1 + $0x1c] sm:$0xf]
    %v65 = vld [vmem:[%s3] sm:$0xf]
    %v66 = vld [vmem:[%s3 + $0x4] sm:$0xf]
    %v75 = vunpack.c.l.b16 %v57
    %v76 = vunpack.c.l.b16 %v58
    %v77 = vunpack.c.l.b16 %v59
    %v78 = vunpack.c.l.b16 %v60
    %v79 = vunpack.c.l.b16 %v61
    %v80 = vunpack.c.l.b16 %v62
    %v81 = vunpack.c.l.b16 %v63
    %v82 = vunpack.c.l.b16 %v64
    %v83 = vpack.c.b16 %v76, %v75
    %v84 = vpack.c.b16 %v78, %v77
    %v85 = vpack.c.b16 %v80, %v79
    %v86 = vpack.c.b16 %v82, %v81
    %v89 = vunpack.c.l.b16 %v65
    %v90 = vunpack.c.l.b16 %v66
    %v91 = vpack.c.b16 %v90, %v89
    %vm93 = vcmask 130048
    %v95 = vsel %vm93, %v83, 0
    %v98 = vsel %vm93, %v84, 0
    %v101 = vsel %vm93, %v85, 0
    %v104 = vsel %vm93, %v86, 0
    %106 = vmatprep.subr.bf16.mxu0 0
    %107 = vmatpush1.bf16.msra.mxu0 %v91
    %108 = vmatprep.subr.bf16.mxu0 0
    %109 = vmatpush1.bf16.msra.mxu0 0
    %110 = vmatprep.subr.bf16.mxu0 0
    %111 = vmatpush1.bf16.msra.mxu0 0
    %112 = vmatprep.subr.bf16.mxu0 0
    %113 = vmatpush1.bf16.msra.mxu0 0
    %114 = vmatprep.subr.bf16.mxu0 0
    %115 = vmatpush1.bf16.msra.mxu0 0
    %116 = vmatprep.subr.bf16.mxu0 0
    %117 = vmatpush1.bf16.msra.mxu0 0
    %118 = vmatprep.subr.bf16.mxu0 0
    %119 = vmatpush1.bf16.msra.mxu0 0
    %120 = vmatprep.subr.bf16.mxu0 0
    %121 = vmatpush1.bf16.msra.mxu0 0
    %122 = vmatprep.subr.bf16.mxu0 0
    %123 = vmatpush1.bf16.msra.mxu0 0
    %124 = vmatprep.subr.bf16.mxu0 0
    %125 = vmatpush1.bf16.msra.mxu0 0
    %126 = vmatprep.subr.bf16.mxu0 0
    %127 = vmatpush1.bf16.msra.mxu0 0
    %128 = vmatprep.subr.bf16.mxu0 0
    %129 = vmatpush1.bf16.msra.mxu0 0
    %130 = vmatprep.subr.bf16.mxu0 0
    %131 = vmatpush1.bf16.msra.mxu0 0
    %132 = vmatprep.subr.bf16.mxu0 0
    %133 = vmatpush1.bf16.msra.mxu0 0
    %134 = vmatprep.subr.bf16.mxu0 0
    %135 = vmatpush1.bf16.msra.mxu0 0
    %136 = vmatprep.subr.bf16.mxu0 0
    %137 = vmatpush1.bf16.msra.mxu0 0
    %138 = vmatprep.mubr.bf16.mxu0 0
    %139 = vmatmul.mubr.bf16.gmra.mrb[0].mxu0 %v95
    %v140 = vpop.f32.mrb[0].mxu0
    %v141 = vadd.f32 0.0, %v140
    %v142 = vpop.f32.mrb[0].mxu0
    %v143 = vpop.f32.mrb[0].mxu0
    %v144 = vadd.f32 0.0, %v143
    %v145 = vpop.f32.mrb[0].mxu0
    %146 = vmatprep.mubr.bf16.mxu0 0
    %147 = vmatmul.mubr.bf16.gmra.mrb[0].mxu0 %v98
    %v148 = vpop.f32.mrb[0].mxu0
    %v149 = vadd.f32 0.0, %v148
    %v150 = vpop.f32.mrb[0].mxu0
    %v151 = vpop.f32.mrb[0].mxu0
    %v152 = vadd.f32 0.0, %v151
    %v153 = vpop.f32.mrb[0].mxu0
    %154 = vmatprep.mubr.bf16.mxu0 0
    %155 = vmatmul.mubr.bf16.gmra.mrb[0].mxu0 %v101
    %v156 = vpop.f32.mrb[0].mxu0
    %v157 = vadd.f32 0.0, %v156
    %v158 = vpop.f32.mrb[0].mxu0
    %v159 = vpop.f32.mrb[0].mxu0
    %v160 = vadd.f32 0.0, %v159
    %v161 = vpop.f32.mrb[0].mxu0
    %162 = vmatprep.mubr.bf16.mxu0 0
    %163 = vmatmul.mubr.bf16.gmra.mrb[0].mxu0 %v104
    %v164 = vpop.f32.mrb[0].mxu0
    %v165 = vadd.f32 0.0, %v164
    %v166 = vpop.f32.mrb[0].mxu0
    %v167 = vpop.f32.mrb[0].mxu0
    %v168 = vadd.f32 0.0, %v167
    %v169 = vpop.f32.mrb[0].mxu0
    %170 = vdwg.mxu0
    %v171 = vld [vmem:[#allocation2] sm:$0xf]
    %v172 = vld [vmem:[%s4] sm:$0xf]
    %v173 = vld [vmem:[%s4 + $0x4] sm:$0xf]
    %v174 = vld [vmem:[%s5] sm:$0x1]
    %v176 = vlaneseq
    %v177 = vshrl.u32 %v176, 7
    %v178 = vsub.s32 0, %v177
    %v179 = vrot.slane %v174, %v178
    %v183 = vunpack.c.l.b16 %v172
    %v184 = vunpack.c.l.b16 %v173
    %v185 = vpack.c.b16 %v184, %v183
    %v188 = vsel %vm93, %v171, 0
    %190 = vmatprep.subr.bf16.mxu0 0
    %191 = vmatpush1.bf16.msra.mxu0 %v185
    %192 = vmatprep.subr.bf16.mxu0 0
    %193 = vmatpush1.bf16.msra.mxu0 0
    %194 = vmatprep.subr.bf16.mxu0 0
    %195 = vmatpush1.bf16.msra.mxu0 0
    %196 = vmatprep.subr.bf16.mxu0 0
    %197 = vmatpush1.bf16.msra.mxu0 0
    %198 = vmatprep.subr.bf16.mxu0 0
    %199 = vmatpush1.bf16.msra.mxu0 0
    %200 = vmatprep.subr.bf16.mxu0 0
    %201 = vmatpush1.bf16.msra.mxu0 0
    %202 = vmatprep.subr.bf16.mxu0 0
    %203 = vmatpush1.bf16.msra.mxu0 0
    %204 = vmatprep.subr.bf16.mxu0 0
    %205 = vmatpush1.bf16.msra.mxu0 0
    %206 = vmatprep.subr.bf16.mxu0 0
    %207 = vmatpush1.bf16.msra.mxu0 0
    %208 = vmatprep.subr.bf16.mxu0 0
    %209 = vmatpush1.bf16.msra.mxu0 0
    %210 = vmatprep.subr.bf16.mxu0 0
    %211 = vmatpush1.bf16.msra.mxu0 0
    %212 = vmatprep.subr.bf16.mxu0 0
    %213 = vmatpush1.bf16.msra.mxu0 0
    %214 = vmatprep.subr.bf16.mxu0 0
    %215 = vmatpush1.bf16.msra.mxu0 0
    %216 = vmatprep.subr.bf16.mxu0 0
    %217 = vmatpush1.bf16.msra.mxu0 0
    %218 = vmatprep.subr.bf16.mxu0 0
    %219 = vmatpush1.bf16.msra.mxu0 0
    %220 = vmatprep.subr.bf16.mxu0 0
    %221 = vmatpush1.bf16.msra.mxu0 0
    %222 = vmatprep.mubr.bf16.mxu0 0
    %223 = vmatmul.mubr.bf16.gmra.mrb[0].mxu0 %v188
    %v224 = vpop.f32.mrb[0].mxu0
    %v225 = vadd.f32 %v179, %v224
    %v226 = vpop.f32.mrb[0].mxu0
    %v227 = vpop.f32.mrb[0].mxu0
    %v228 = vpop.f32.mrb[0].mxu0
    %229 = vdwg.mxu0
    %v231 = vcombine.high %v225, %v225
    %v233 = vunpack.c.l.s4 1966171168
    %v234 = vunpack.c.0.s8 %v233
    %v235 = vlaneseq
    %v236 = vshrl.u32 %v235, 7
    %v237 = vsub.s32 %v234, %v236
    %v238 = vrot.slane %v225, %v237
    %v240 = vunpack.c.l.s4 1966171168
    %v241 = vunpack.c.0.s8 %v240
    %v242 = vlaneseq
    %v243 = vshrl.u32 %v242, 7
    %v244 = vsub.s32 %v241, %v243
    %v245 = vrot.slane %v231, %v244
    %v246 = vcombine.high %v238, %v238
    %v247 = vcombine.high %v245, %v245
    %v249 = vunpack.c.l.s4 1966171168
    %v250 = vunpack.c.0.s8 %v249
    %v251 = vlaneseq
    %v252 = vshrl.u32 %v251, 7
    %v253 = vsub.s32 %v250, %v252
    %v254 = vrot.slane %v238, %v253
    %v256 = vunpack.c.l.s4 1966171168
    %v257 = vunpack.c.0.s8 %v256
    %v258 = vlaneseq
    %v259 = vshrl.u32 %v258, 7
    %v260 = vsub.s32 %v257, %v259
    %v261 = vrot.slane %v245, %v260
    %v263 = vunpack.c.l.s4 1966171168
    %v264 = vunpack.c.0.s8 %v263
    %v265 = vlaneseq
    %v266 = vshrl.u32 %v265, 7
    %v267 = vsub.s32 %v264, %v266
    %v268 = vrot.slane %v246, %v267
    %v270 = vunpack.c.l.s4 1966171168
    %v271 = vunpack.c.0.s8 %v270
    %v272 = vlaneseq
    %v273 = vshrl.u32 %v272, 7
    %v274 = vsub.s32 %v271, %v273
    %v275 = vrot.slane %v247, %v274
    %v276 = vcombine.high %v254, %v254
    %v277 = vcombine.high %v261, %v261
    %v278 = vcombine.high %v268, %v268
    %v279 = vcombine.high %v275, %v275
    %v280 = vlaneseq
    %v281 = vshrl.u32 %v280, 7
    %v282 = vsub.s32 0, %v281
    %v283 = vrot.slane %v254, %v282
    %v284 = vlaneseq
    %v285 = vshrl.u32 %v284, 7
    %v286 = vsub.s32 0, %v285
    %v287 = vrot.slane %v268, %v286
    %v288 = vlaneseq
    %v289 = vshrl.u32 %v288, 7
    %v290 = vsub.s32 0, %v289
    %v291 = vrot.slane %v276, %v290
    %v292 = vlaneseq
    %v293 = vshrl.u32 %v292, 7
    %v294 = vsub.s32 0, %v293
    %v295 = vrot.slane %v278, %v294
    %v296 = vlaneseq
    %v297 = vshrl.u32 %v296, 7
    %v298 = vsub.s32 0, %v297
    %v299 = vrot.slane %v261, %v298
    %v300 = vlaneseq
    %v301 = vshrl.u32 %v300, 7
    %v302 = vsub.s32 0, %v301
    %v303 = vrot.slane %v275, %v302
    %v304 = vlaneseq
    %v305 = vshrl.u32 %v304, 7
    %v306 = vsub.s32 0, %v305
    %v307 = vrot.slane %v277, %v306
    %v308 = vlaneseq
    %v309 = vshrl.u32 %v308, 7
    %v310 = vsub.s32 0, %v309
    %v311 = vrot.slane %v279, %v310
    %v320 = vadd.f32 %v141, %v283
    %v321 = vadd.f32 %v144, %v287
    %v322 = vadd.f32 %v149, %v291
    %v323 = vadd.f32 %v152, %v295
    %v324 = vadd.f32 %v157, %v299
    %v325 = vadd.f32 %v160, %v303
    %v326 = vadd.f32 %v165, %v307
    %v327 = vadd.f32 %v168, %v311
    %v328 = vmax.f32 %v320, 0.0
    %v329 = vmax.f32 %v321, 0.0
    %v330 = vmax.f32 %v322, 0.0
    %v331 = vmax.f32 %v323, 0.0
    %v332 = vmax.f32 %v324, 0.0
    %v333 = vmax.f32 %v325, 0.0
    %v334 = vmax.f32 %v326, 0.0
    %v335 = vmax.f32 %v327, 0.0
    %v336 = vld [vmem:[%s6] sm:$0xff]
    %v337 = vld [vmem:[%s6 + $0x8] sm:$0xff]
    %v338 = vld [vmem:[%s6 + $0x10] sm:$0xff]
    %v339 = vld [vmem:[%s6 + $0x18] sm:$0xff]
    %vm340 = vcmask 261120
    %v342 = vsel %vm340, %v328, 0
    %v345 = vsel %vm340, %v329, 0
    %v348 = vsel %vm340, %v330, 0
    %v351 = vsel %vm340, %v331, 0
    %v354 = vsel %vm340, %v332, 0
    %v357 = vsel %vm340, %v333, 0
    %v360 = vsel %vm340, %v334, 0
    %v363 = vsel %vm340, %v335, 0
    %365 = vmatprep.subr.mxu0 0.0
    %366 = vmatpush1.msra.mxu0 %v336
    %367 = vmatprep.subr.mxu0 0.0
    %368 = vmatpush1.msra.mxu0 %v337
    %369 = vmatprep.subr.mxu0 0.0
    %370 = vmatpush1.msra.mxu0 %v338
    %371 = vmatprep.subr.mxu0 0.0
    %372 = vmatpush1.msra.mxu0 %v339
    %373 = vmatprep.subr.mxu0 0.0
    %374 = vmatpush1.msra.mxu0 0.0
    %375 = vmatprep.subr.mxu0 0.0
    %376 = vmatpush1.msra.mxu0 0.0
    %377 = vmatprep.subr.mxu0 0.0
    %378 = vmatpush1.msra.mxu0 0.0
    %379 = vmatprep.subr.mxu0 0.0
    %380 = vmatpush1.msra.mxu0 0.0
    %381 = vmatprep.subr.mxu0 0.0
    %382 = vmatpush1.msra.mxu0 0.0
    %383 = vmatprep.subr.mxu0 0.0
    %384 = vmatpush1.msra.mxu0 0.0
    %385 = vmatprep.subr.mxu0 0.0
    %386 = vmatpush1.msra.mxu0 0.0
    %387 = vmatprep.subr.mxu0 0.0
    %388 = vmatpush1.msra.mxu0 0.0
    %389 = vmatprep.subr.mxu0 0.0
    %390 = vmatpush1.msra.mxu0 0.0
    %391 = vmatprep.subr.mxu0 0.0
    %392 = vmatpush1.msra.mxu0 0.0
    %393 = vmatprep.subr.mxu0 0.0
    %394 = vmatpush1.msra.mxu0 0.0
    %395 = vmatprep.subr.mxu0 0.0
    %396 = vmatpush1.msra.mxu0 0.0
    %397 = vmatprep.subr.mxu0 0.0
    %398 = vmatpush1.msra.mxu0 0.0
    %399 = vmatprep.subr.mxu0 0.0
    %400 = vmatpush1.msra.mxu0 0.0
    %401 = vmatprep.subr.mxu0 0.0
    %402 = vmatpush1.msra.mxu0 0.0
    %403 = vmatprep.subr.mxu0 0.0
    %404 = vmatpush1.msra.mxu0 0.0
    %405 = vmatprep.subr.mxu0 0.0
    %406 = vmatpush1.msra.mxu0 0.0
    %407 = vmatprep.subr.mxu0 0.0
    %408 = vmatpush1.msra.mxu0 0.0
    %409 = vmatprep.subr.mxu0 0.0
    %410 = vmatpush1.msra.mxu0 0.0
    %411 = vmatprep.subr.mxu0 0.0
    %412 = vmatpush1.msra.mxu0 0.0
    %413 = vmatprep.subr.mxu0 0.0
    %414 = vmatpush1.msra.mxu0 0.0
    %415 = vmatprep.subr.mxu0 0.0
    %416 = vmatpush1.msra.mxu0 0.0
    %417 = vmatprep.subr.mxu0 0.0
    %418 = vmatpush1.msra.mxu0 0.0
    %419 = vmatprep.subr.mxu0 0.0
    %420 = vmatpush1.msra.mxu0 0.0
    %421 = vmatprep.subr.mxu0 0.0
    %422 = vmatpush1.msra.mxu0 0.0
    %423 = vmatprep.subr.mxu0 0.0
    %424 = vmatpush1.msra.mxu0 0.0
    %425 = vmatprep.subr.mxu0 0.0
    %426 = vmatpush1.msra.mxu0 0.0
    %427 = vmatprep.subr.mxu0 0.0
    %428 = vmatpush1.msra.mxu0 0.0
    %429 = vmatprep.mubr.f32.mxu0 0.0
    %430 = vmatmul.mubr.f32.gmra.mrb[0].mxu0 %v342
    %v431 = vpop.f32.mrb[0].mxu0
    %v432 = vadd.f32 0.0, %v431
    %v433 = vpop.f32.mrb[0].mxu0
    %434 = vmatprep.mubr.f32.mxu0 0.0
    %435 = vmatmul.mubr.f32.gmra.mrb[0].mxu0 %v345
    %v436 = vpop.f32.mrb[0].mxu0
    %v437 = vadd.f32 0.0, %v436
    %v438 = vpop.f32.mrb[0].mxu0
    %439 = vmatprep.mubr.f32.mxu0 0.0
    %440 = vmatmul.mubr.f32.gmra.mrb[0].mxu0 %v348
    %v441 = vpop.f32.mrb[0].mxu0
    %v442 = vadd.f32 0.0, %v441
    %v443 = vpop.f32.mrb[0].mxu0
    %444 = vmatprep.mubr.f32.mxu0 0.0
    %445 = vmatmul.mubr.f32.gmra.mrb[0].mxu0 %v351
    %v446 = vpop.f32.mrb[0].mxu0
    %v447 = vadd.f32 0.0, %v446
    %v448 = vpop.f32.mrb[0].mxu0
    %449 = vmatprep.mubr.f32.mxu0 0.0
    %450 = vmatmul.mubr.f32.gmra.mrb[0].mxu0 %v354
    %v451 = vpop.f32.mrb[0].mxu0
    %v452 = vadd.f32 0.0, %v451
    %v453 = vpop.f32.mrb[0].mxu0
    %454 = vmatprep.mubr.f32.mxu0 0.0
    %455 = vmatmul.mubr.f32.gmra.mrb[0].mxu0 %v357
    %v456 = vpop.f32.mrb[0].mxu0
    %v457 = vadd.f32 0.0, %v456
    %v458 = vpop.f32.mrb[0].mxu0
    %459 = vmatprep.mubr.f32.mxu0 0.0
    %460 = vmatmul.mubr.f32.gmra.mrb[0].mxu0 %v360
    %v461 = vpop.f32.mrb[0].mxu0
    %v462 = vadd.f32 0.0, %v461
    %v463 = vpop.f32.mrb[0].mxu0
    %464 = vmatprep.mubr.f32.mxu0 0.0
    %465 = vmatmul.mubr.f32.gmra.mrb[0].mxu0 %v363
    %v466 = vpop.f32.mrb[0].mxu0
    %v467 = vadd.f32 0.0, %v466
    %v468 = vpop.f32.mrb[0].mxu0
    %469 = vdwg.mxu0
    %478 = vset.pattern.permute.xlu0 0
    %479 = vperm.xlu0 %478, %v432
    %v480 = vpop.permute.xlu0 %479
    %481 = vset.pattern.permute.xlu0 0
    %482 = vperm.xlu0 %481, %v437
    %v483 = vpop.permute.xlu0 %482
    %484 = vset.pattern.permute.xlu0 0
    %485 = vperm.xlu0 %484, %v442
    %v486 = vpop.permute.xlu0 %485
    %487 = vset.pattern.permute.xlu0 0
    %488 = vperm.xlu0 %487, %v447
    %v489 = vpop.permute.xlu0 %488
    %490 = vset.pattern.permute.xlu0 0
    %491 = vperm.xlu0 %490, %v452
    %v492 = vpop.permute.xlu0 %491
    %493 = vset.pattern.permute.xlu0 0
    %494 = vperm.xlu0 %493, %v457
    %v495 = vpop.permute.xlu0 %494
    %496 = vset.pattern.permute.xlu0 0
    %497 = vperm.xlu0 %496, %v462
    %v498 = vpop.permute.xlu0 %497
    %499 = vset.pattern.permute.xlu0 0
    %500 = vperm.xlu0 %499, %v467
    %v501 = vpop.permute.xlu0 %500
    %v502 = vlaneseq
    %v503 = vand.u32 %v502, 127
    %v504 = vlaneseq
    %v505 = vshrl.u32 %v504, 7
    %v506 = vsub.s32 %v503, %v505
    %v507 = vrot.slane %v480, %v506
    %v508 = vlaneseq
    %v509 = vshrl.u32 %v508, 7
    %v510 = vsub.s32 %v503, %v509
    %v511 = vrot.slane %v483, %v510
    %v512 = vlaneseq
    %v513 = vshrl.u32 %v512, 7
    %v514 = vsub.s32 %v503, %v513
    %v515 = vrot.slane %v486, %v514
    %v516 = vlaneseq
    %v517 = vshrl.u32 %v516, 7
    %v518 = vsub.s32 %v503, %v517
    %v519 = vrot.slane %v489, %v518
    %v520 = vlaneseq
    %v521 = vshrl.u32 %v520, 7
    %v522 = vsub.s32 %v503, %v521
    %v523 = vrot.slane %v492, %v522
    %v524 = vlaneseq
    %v525 = vshrl.u32 %v524, 7
    %v526 = vsub.s32 %v503, %v525
    %v527 = vrot.slane %v495, %v526
    %v528 = vlaneseq
    %v529 = vshrl.u32 %v528, 7
    %v530 = vsub.s32 %v503, %v529
    %v531 = vrot.slane %v498, %v530
    %v532 = vlaneseq
    %v533 = vshrl.u32 %v532, 7
    %v534 = vsub.s32 %v503, %v533
    %v535 = vrot.slane %v501, %v534
    %vm536 = vcmask 1041409
    %v537 = vsel %vm536, %v511, %v507
    %vm538 = vcmask 1042434
    %v539 = vsel %vm538, %v515, %v537
    %vm540 = vcmask 1043459
    %v541 = vsel %vm540, %v519, %v539
    %vm542 = vcmask 1044484
    %v543 = vsel %vm542, %v523, %v541
    %vm544 = vcmask 1045509
    %v545 = vsel %vm544, %v527, %v543
    %vm546 = vcmask 1046534
    %v547 = vsel %vm546, %v531, %v545
    %vm548 = vcmask 1047559
    %v549 = vsel %vm548, %v535, %v547
    %vm551 = vcmask 64512
    %v552 = vsel %vm551, %v549, -inf
    %553 = vmax.xlane.f32.xlu0 %v552
    %v554 = vpop.xlane.xlu0 %553
    %v556 = vlaneseq
    %v557 = vshrl.u32 %v556, 7
    %v558 = vsub.s32 0, %v557
    %v559 = vrot.slane %v554, %v558
    %v560 = vlaneseq
    %v561 = vshrl.u32 %v560, 7
    %v562 = vsub.s32 1, %v561
    %v563 = vrot.slane %v554, %v562
    %v564 = vlaneseq
    %v565 = vshrl.u32 %v564, 7
    %v566 = vsub.s32 2, %v565
    %v567 = vrot.slane %v554, %v566
    %v568 = vlaneseq
    %v569 = vshrl.u32 %v568, 7
    %v570 = vsub.s32 3, %v569
    %v571 = vrot.slane %v554, %v570
    %v572 = vlaneseq
    %v573 = vshrl.u32 %v572, 7
    %v574 = vsub.s32 4, %v573
    %v575 = vrot.slane %v554, %v574
    %v576 = vlaneseq
    %v577 = vshrl.u32 %v576, 7
    %v578 = vsub.s32 5, %v577
    %v579 = vrot.slane %v554, %v578
    %v580 = vlaneseq
    %v581 = vshrl.u32 %v580, 7
    %v582 = vsub.s32 6, %v581
    %v583 = vrot.slane %v554, %v582
    %v584 = vlaneseq
    %v585 = vshrl.u32 %v584, 7
    %v586 = vsub.s32 7, %v585
    %v587 = vrot.slane %v554, %v586
    %v596 = vsub.f32 %v432, %v559
    %v597 = vsub.f32 %v437, %v563
    %v598 = vsub.f32 %v442, %v567
    %v599 = vsub.f32 %v447, %v571
    %v600 = vsub.f32 %v452, %v575
    %v601 = vsub.f32 %v457, %v579
    %v602 = vsub.f32 %v462, %v583
    %v603 = vsub.f32 %v467, %v587
    %v604 = vmul.f32 %v596, 1.442695
    %v605 = vpow.pop %v604
    %v606 = vmul.f32 %v597, 1.442695
    %v607 = vpow.pop %v606
    %v608 = vmul.f32 %v598, 1.442695
    %v609 = vpow.pop %v608
    %v610 = vmul.f32 %v599, 1.442695
    %v611 = vpow.pop %v610
    %v612 = vmul.f32 %v600, 1.442695
    %v613 = vpow.pop %v612
    %v614 = vmul.f32 %v601, 1.442695
    %v615 = vpow.pop %v614
    %v616 = vmul.f32 %v602, 1.442695
    %v617 = vpow.pop %v616
    %v618 = vmul.f32 %v603, 1.442695
    %v619 = vpow.pop %v618
    %628 = vset.pattern.permute.xlu0 0
    %629 = vperm.xlu0 %628, %v605
    %v630 = vpop.permute.xlu0 %629
    %631 = vset.pattern.permute.xlu0 0
    %632 = vperm.xlu0 %631, %v607
    %v633 = vpop.permute.xlu0 %632
    %634 = vset.pattern.permute.xlu0 0
    %635 = vperm.xlu0 %634, %v609
    %v636 = vpop.permute.xlu0 %635
    %637 = vset.pattern.permute.xlu0 0
    %638 = vperm.xlu0 %637, %v611
    %v639 = vpop.permute.xlu0 %638
    %640 = vset.pattern.permute.xlu0 0
    %641 = vperm.xlu0 %640, %v613
    %v642 = vpop.permute.xlu0 %641
    %643 = vset.pattern.permute.xlu0 0
    %644 = vperm.xlu0 %643, %v615
    %v645 = vpop.permute.xlu0 %644
    %646 = vset.pattern.permute.xlu0 0
    %647 = vperm.xlu0 %646, %v617
    %v648 = vpop.permute.xlu0 %647
    %649 = vset.pattern.permute.xlu0 0
    %650 = vperm.xlu0 %649, %v619
    %v651 = vpop.permute.xlu0 %650
    %v652 = vlaneseq
    %v653 = vshrl.u32 %v652, 7
    %v654 = vsub.s32 %v503, %v653
    %v655 = vrot.slane %v630, %v654
    %v656 = vlaneseq
    %v657 = vshrl.u32 %v656, 7
    %v658 = vsub.s32 %v503, %v657
    %v659 = vrot.slane %v633, %v658
    %v660 = vlaneseq
    %v661 = vshrl.u32 %v660, 7
    %v662 = vsub.s32 %v503, %v661
    %v663 = vrot.slane %v636, %v662
    %v664 = vlaneseq
    %v665 = vshrl.u32 %v664, 7
    %v666 = vsub.s32 %v503, %v665
    %v667 = vrot.slane %v639, %v666
    %v668 = vlaneseq
    %v669 = vshrl.u32 %v668, 7
    %v670 = vsub.s32 %v503, %v669
    %v671 = vrot.slane %v642, %v670
    %v672 = vlaneseq
    %v673 = vshrl.u32 %v672, 7
    %v674 = vsub.s32 %v503, %v673
    %v675 = vrot.slane %v645, %v674
    %v676 = vlaneseq
    %v677 = vshrl.u32 %v676, 7
    %v678 = vsub.s32 %v503, %v677
    %v679 = vrot.slane %v648, %v678
    %v680 = vlaneseq
    %v681 = vshrl.u32 %v680, 7
    %v682 = vsub.s32 %v503, %v681
    %v683 = vrot.slane %v651, %v682
    %v684 = vsel %vm536, %v659, %v655
    %v685 = vsel %vm538, %v663, %v684
    %v686 = vsel %vm540, %v667, %v685
    %v687 = vsel %vm542, %v671, %v686
    %v688 = vsel %vm544, %v675, %v687
    %v689 = vsel %vm546, %v679, %v688
    %v690 = vsel %vm548, %v683, %v689
    %v692 = vsel %vm551, %v690, 0.0
    %693 = vadd.xlane.f32.xlu0 %v692
    %v694 = vpop.xlane.xlu0 %693
    %v695 = vrcp.pop %v694
    %v697 = vlaneseq
    %v698 = vshrl.u32 %v697, 7
    %v699 = vsub.s32 0, %v698
    %v700 = vrot.slane %v695, %v699
    %v701 = vlaneseq
    %v702 = vshrl.u32 %v701, 7
    %v703 = vsub.s32 1, %v702
    %v704 = vrot.slane %v695, %v703
    %v705 = vlaneseq
    %v706 = vshrl.u32 %v705, 7
    %v707 = vsub.s32 2, %v706
    %v708 = vrot.slane %v695, %v707
    %v709 = vlaneseq
    %v710 = vshrl.u32 %v709, 7
    %v711 = vsub.s32 3, %v710
    %v712 = vrot.slane %v695, %v711
    %v713 = vlaneseq
    %v714 = vshrl.u32 %v713, 7
    %v715 = vsub.s32 4, %v714
    %v716 = vrot.slane %v695, %v715
    %v717 = vlaneseq
    %v718 = vshrl.u32 %v717, 7
    %v719 = vsub.s32 5, %v718
    %v720 = vrot.slane %v695, %v719
    %v721 = vlaneseq
    %v722 = vshrl.u32 %v721, 7
    %v723 = vsub.s32 6, %v722
    %v724 = vrot.slane %v695, %v723
    %v725 = vlaneseq
    %v726 = vshrl.u32 %v725, 7
    %v727 = vsub.s32 7, %v726
    %v728 = vrot.slane %v695, %v727
    %v737 = vmul.f32 %v605, %v700
    %v738 = vmul.f32 %v607, %v704
    %v739 = vmul.f32 %v609, %v708
    %v740 = vmul.f32 %v611, %v712
    %v741 = vmul.f32 %v613, %v716
    %v742 = vmul.f32 %v615, %v720
    %v743 = vmul.f32 %v617, %v724
    %v744 = vmul.f32 %v619, %v728
    %753 = vset.pattern.permute.xlu0 0
    %754 = vperm.xlu0 %753, %v737
    %v755 = vpop.permute.xlu0 %754
    %756 = vset.pattern.permute.xlu0 0
    %757 = vperm.xlu0 %756, %v738
    %v758 = vpop.permute.xlu0 %757
    %759 = vset.pattern.permute.xlu0 0
    %760 = vperm.xlu0 %759, %v739
    %v761 = vpop.permute.xlu0 %760
    %762 = vset.pattern.permute.xlu0 0
    %763 = vperm.xlu0 %762, %v740
    %v764 = vpop.permute.xlu0 %763
    %765 = vset.pattern.permute.xlu0 0
    %766 = vperm.xlu0 %765, %v741
    %v767 = vpop.permute.xlu0 %766
    %768 = vset.pattern.permute.xlu0 0
    %769 = vperm.xlu0 %768, %v742
    %v770 = vpop.permute.xlu0 %769
    %771 = vset.pattern.permute.xlu0 0
    %772 = vperm.xlu0 %771, %v743
    %v773 = vpop.permute.xlu0 %772
    %774 = vset.pattern.permute.xlu0 0
    %775 = vperm.xlu0 %774, %v744
    %v776 = vpop.permute.xlu0 %775
    %v777 = vlaneseq
    %v778 = vshrl.u32 %v777, 7
    %v779 = vsub.s32 %v503, %v778
    %v780 = vrot.slane %v755, %v779
    %v781 = vlaneseq
    %v782 = vshrl.u32 %v781, 7
    %v783 = vsub.s32 %v503, %v782
    %v784 = vrot.slane %v758, %v783
    %v785 = vlaneseq
    %v786 = vshrl.u32 %v785, 7
    %v787 = vsub.s32 %v503, %v786
    %v788 = vrot.slane %v761, %v787
    %v789 = vlaneseq
    %v790 = vshrl.u32 %v789, 7
    %v791 = vsub.s32 %v503, %v790
    %v792 = vrot.slane %v764, %v791
    %v793 = vlaneseq
    %v794 = vshrl.u32 %v793, 7
    %v795 = vsub.s32 %v503, %v794
    %v796 = vrot.slane %v767, %v795
    %v797 = vlaneseq
    %v798 = vshrl.u32 %v797, 7
    %v799 = vsub.s32 %v503, %v798
    %v800 = vrot.slane %v770, %v799
    %v801 = vlaneseq
    %v802 = vshrl.u32 %v801, 7
    %v803 = vsub.s32 %v503, %v802
    %v804 = vrot.slane %v773, %v803
    %v805 = vlaneseq
    %v806 = vshrl.u32 %v805, 7
    %v807 = vsub.s32 %v503, %v806
    %v808 = vrot.slane %v776, %v807
    %v809 = vsel %vm536, %v784, %v780
    %v810 = vsel %vm538, %v788, %v809
    %v811 = vsel %vm540, %v792, %v810
    %v812 = vsel %vm542, %v796, %v811
    %v813 = vsel %vm544, %v800, %v812
    %v814 = vsel %vm546, %v804, %v813
    %v815 = vsel %vm548, %v808, %v814
    %817 = vst.msk [vmem:[#allocation8] sm:$0xff] %vm551, %v815
    %v818 = vld [vmem:[#allocation5] sm:$0xf]
    %v819 = vld [vmem:[#allocation5 + $0x4] sm:$0xf]
    %v820 = vld [vmem:[#allocation5 + $0x8] sm:$0xf]
    %v821 = vld [vmem:[#allocation5 + $0xc] sm:$0xf]
    %v822 = vld [vmem:[#allocation5 + $0x10] sm:$0xf]
    %v823 = vld [vmem:[#allocation5 + $0x14] sm:$0xf]
    %v824 = vld [vmem:[#allocation5 + $0x18] sm:$0xf]
    %v825 = vld [vmem:[#allocation5 + $0x1c] sm:$0xf]
    %v826 = vunpack.c.l.bf16 %v818
    %v827 = vunpack.c.l.bf16 %v819
    %v828 = vunpack.c.l.bf16 %v820
    %v829 = vunpack.c.l.bf16 %v821
    %v830 = vunpack.c.l.bf16 %v822
    %v831 = vunpack.c.l.bf16 %v823
    %v832 = vunpack.c.l.bf16 %v824
    %v833 = vunpack.c.l.bf16 %v825
    %v842 = vmul.f32 %v755, %v826
    %v843 = vmul.f32 %v758, %v827
    %v844 = vmul.f32 %v761, %v828
    %v845 = vmul.f32 %v764, %v829
    %v846 = vmul.f32 %v767, %v830
    %v847 = vmul.f32 %v770, %v831
    %v848 = vmul.f32 %v773, %v832
    %v849 = vmul.f32 %v776, %v833
    %v850 = vsel %vm93, %v842, 0.0
    %v851 = vrot.slane %v850, 4
    %v852 = vadd.f32 %v850, %v851
    %v853 = vrot.slane %v852, 2
    %v854 = vadd.f32 %v852, %v853
    %v855 = vrot.slane %v854, 1
    %v856 = vadd.f32 %v854, %v855
    %v857 = vsel %vm93, %v843, 0.0
    %v858 = vrot.slane %v857, 4
    %v859 = vadd.f32 %v857, %v858
    %v860 = vrot.slane %v859, 2
    %v861 = vadd.f32 %v859, %v860
    %v862 = vrot.slane %v861, 1
    %v863 = vadd.f32 %v861, %v862
    %v864 = vsel %vm93, %v844, 0.0
    %v865 = vrot.slane %v864, 4
    %v866 = vadd.f32 %v864, %v865
    %v867 = vrot.slane %v866, 2
    %v868 = vadd.f32 %v866, %v867
    %v869 = vrot.slane %v868, 1
    %v870 = vadd.f32 %v868, %v869
    %v871 = vsel %vm93, %v845, 0.0
    %v872 = vrot.slane %v871, 4
    %v873 = vadd.f32 %v871, %v872
    %v874 = vrot.slane %v873, 2
    %v875 = vadd.f32 %v873, %v874
    %v876 = vrot.slane %v875, 1
    %v877 = vadd.f32 %v875, %v876
    %v878 = vsel %vm93, %v846, 0.0
    %v879 = vrot.slane %v878, 4
    %v880 = vadd.f32 %v878, %v879
    %v881 = vrot.slane %v880, 2
    %v882 = vadd.f32 %v880, %v881
    %v883 = vrot.slane %v882, 1
    %v884 = vadd.f32 %v882, %v883
    %v885 = vsel %vm93, %v847, 0.0
    %v886 = vrot.slane %v885, 4
    %v887 = vadd.f32 %v885, %v886
    %v888 = vrot.slane %v887, 2
    %v889 = vadd.f32 %v887, %v888
    %v890 = vrot.slane %v889, 1
    %v891 = vadd.f32 %v889, %v890
    %v892 = vsel %vm93, %v848, 0.0
    %v893 = vrot.slane %v892, 4
    %v894 = vadd.f32 %v892, %v893
    %v895 = vrot.slane %v894, 2
    %v896 = vadd.f32 %v894, %v895
    %v897 = vrot.slane %v896, 1
    %v898 = vadd.f32 %v896, %v897
    %v899 = vsel %vm93, %v849, 0.0
    %v900 = vrot.slane %v899, 4
    %v901 = vadd.f32 %v899, %v900
    %v902 = vrot.slane %v901, 2
    %v903 = vadd.f32 %v901, %v902
    %v904 = vrot.slane %v903, 1
    %v905 = vadd.f32 %v903, %v904
    %v914 = vsel %vm536, %v863, %v856
    %v915 = vsel %vm538, %v870, %v914
    %v916 = vsel %vm540, %v877, %v915
    %v917 = vsel %vm542, %v884, %v916
    %v918 = vsel %vm544, %v891, %v917
    %v919 = vsel %vm546, %v898, %v918
    %v920 = vsel %vm548, %v905, %v919
    %922 = vst.msk [vmem:[#allocation7] sm:$0xff] %vm93, %v920
    // Predicated region
    $region38: #{tpu_custom_call.1} parent=1 // pred_check
      _
    $region39: #{tpu_custom_call.1} parent=1 // pred_check_branch
      %924 = sbr.rel (0) target = $region41
    $region40: #{tpu_custom_call.1} parent=1 // pred_region
      %s926 = ssub.s32 128, 128
      %927 = vsyncadd [#allocation4], %s926
      %s929 = sshll.u32 [#allocation7], 4
      %s930 = int_to_ptr.vmem [resolvable:$true] %s929
      %932 = dma.vmem_to_hbm [thread:$0]  %s930, 128, %s7, [#allocation4]
    $region41: #{tpu_custom_call.1} parent=1 // pred_fallthru
      _
    // Predicated region
    $region42: #{tpu_custom_call.1} parent=1 // pred_check
      _
    $region43: #{tpu_custom_call.1} parent=1 // pred_check_branch
      %934 = sbr.rel (0) target = $region45
    $region44: #{tpu_custom_call.1} parent=1 // pred_region
      %s936 = ssub.s32 128, 128
      %937 = vsyncadd [#allocation9], %s936
      %s939 = sshll.u32 [#allocation8], 4
      %s940 = int_to_ptr.vmem [resolvable:$true] %s939
      %942 = dma.vmem_to_hbm [thread:$0]  %s940, 128, %s8, [#allocation9]
    $region45: #{tpu_custom_call.1} parent=1 // pred_fallthru
      _
    // Predicated region
    $region46: #{tpu_custom_call.1} parent=1 // pred_check
      _
    $region47: #{tpu_custom_call.1} parent=1 // pred_check_branch
      %944 = sbr.rel (0) target = $region49
    $region48: #{tpu_custom_call.1} parent=1 // pred_region
      %945 = dma.done [#allocation4], 128
    $region49: #{tpu_custom_call.1} parent=1 // pred_fallthru
      _
    // Predicated region
    $region50: #{tpu_custom_call.1} parent=1 // pred_check
      _
    $region51: #{tpu_custom_call.1} parent=1 // pred_check_branch
      %947 = sbr.rel (0) target = $region53
    $region52: #{tpu_custom_call.1} parent=1 // pred_region
      %948 = dma.done [#allocation9], 128
    $region53: #{tpu_custom_call.1} parent=1 // pred_fallthru
      _
    %949 = vsyncpa [#allocation3], 1
    %950 = vsyncpa [#allocation6], 1
    %951 = vsyncpa [#allocation4], 1
    %952 = vsyncpa [#allocation9], 1

// kernel: tpu_custom_call.1
$region0: #{tpu_custom_call.1}
  #allocation0 [shape = 'u32[]', space=smem, size = 0x4, offset = 0x4, fixed_abs, tag = 'smem constant byte address 0x4 - core index']
  #allocation1 [shape = 'u32[144,128]{1,0:T(1,128)}', space=vmem, size = 0x12000, scoped, tag = 'internal scratch']
  %s0 = inlined_call_operand.hbm [shape: bf16[8,16], index: 0, kind: input, shape index: {}]
  %s1 = inlined_call_operand.vmem [shape: bf16[8,8,16], index: 1, kind: input, shape index: {}]
  %s2 = inlined_call_operand.hbm [shape: bf16[8,8,16], index: 2, kind: input, shape index: {}]
  %s3 = inlined_call_operand.vmem [shape: bf16[16,32], index: 3, kind: input, shape index: {}]
  %s4 = inlined_call_operand.vmem [shape: bf16[16,32], index: 4, kind: input, shape index: {}]
  %s5 = inlined_call_operand.vmem [shape: f32[1,32], index: 5, kind: input, shape index: {}]
  %s6 = inlined_call_operand.vmem [shape: f32[32,1], index: 6, kind: input, shape index: {}]
  %s7 = inlined_call_operand.hbm [shape: f32[8,16], index: 7, kind: output, shape index: {0}]
  %s8 = inlined_call_operand.hbm [shape: f32[8,8], index: 8, kind: output, shape index: {1}]
  %9 = xla_tuple %s7, %s8
  %s10 = sld [smem:[#allocation0]]
  $region54: #{tpu_custom_call.1} parent=0
    _
  %s12 = ssub.s32 1, %s10
  %s13 = scalar_select 0, %s12, %s10
  $region1: #{tpu_custom_call.1} parent=0
    #allocation2 [shape = 'u8[2048]{0}', space=vmem, size = 0x800, scoped, tag = 'input window, operand 0, single buffered']
    #allocation3 [shape = 's32[1]{0}', space=sflag, size = 0x4, scoped, tag = 'scoped memory for tpu_custom_call.1']
    #allocation4 [shape = 's32[1]{0}', space=sflag, size = 0x4, scoped, tag = 'scoped memory for tpu_custom_call.1']
    #allocation5 [shape = 'u8[16384]{0}', space=vmem, size = 0x4000, scoped, tag = 'input window, operand 2, single buffered']
    #allocation6 [shape = 's32[1]{0}', space=sflag, size = 0x4, scoped, tag = 'scoped memory for tpu_custom_call.1']
    #allocation7 [shape = 'u8[4096]{0}', space=vmem, size = 0x1000, scoped, tag = 'output window, operand 0, single buffered']
    #allocation8 [shape = 'u8[4096]{0}', space=vmem, size = 0x1000, scoped, tag = 'output window, operand 1, single buffered']
    #allocation9 [shape = 's32[1]{0}', space=sflag, size = 0x4, scoped, tag = 'scoped memory for tpu_custom_call.1']
    %14 = vsyncpa [#allocation3], 0
    %15 = vsyncpa [#allocation6], 0
    %16 = vsyncpa [#allocation4], 0
    %17 = vsyncpa [#allocation9], 0
    // Predicated region
    $region2: #{tpu_custom_call.1} parent=1 // pred_check
      _
    $region3: #{tpu_custom_call.1} parent=1 // pred_check_branch
      %19 = sbr.rel (0) target = $region5
    $region4: #{tpu_custom_call.1} parent=1 // pred_region
      %s21 = ssub.s32 64, 64
      %22 = vsyncadd [#allocation3], %s21
      %s24 = sshll.u32 [#allocation2], 4
      %s25 = int_to_ptr.vmem [resolvable:$true] %s24
      %27 = dma.hbm_to_vmem [thread:$0]  %s0, 64, %s25, [#allocation3]
    $region5: #{tpu_custom_call.1} parent=1 // pred_fallthru
      _
    // Predicated region
    $region6: #{tpu_custom_call.1} parent=1 // pred_check
      _
    $region7: #{tpu_custom_call.1} parent=1 // pred_check_branch
      %29 = sbr.rel (0) target = $region9
    $region8: #{tpu_custom_call.1} parent=1 // pred_region
      _
    $region9: #{tpu_custom_call.1} parent=1 // pred_fallthru
      _
    // Predicated region
    $region10: #{tpu_custom_call.1} parent=1 // pred_check
      _
    $region11: #{tpu_custom_call.1} parent=1 // pred_check_branch
      %31 = sbr.rel (0) target = $region13
    $region12: #{tpu_custom_call.1} parent=1 // pred_region
      %s33 = ssub.s32 512, 512
      %34 = vsyncadd [#allocation6], %s33
      %s35 = sshll.u32 [#allocation5], 4
      %s36 = int_to_ptr.vmem [resolvable:$true] %s35
      %41 = dma.hbm_to_vmem [thread:$0]  %s2, 512, %s36, [#allocation6], 64, 64, 4
    $region13: #{tpu_custom_call.1} parent=1 // pred_fallthru
      _
    // Predicated region
    $region14: #{tpu_custom_call.1} parent=1 // pred_check
      _
    $region15: #{tpu_custom_call.1} parent=1 // pred_check_branch
      %43 = sbr.rel (0) target = $region17
    $region16: #{tpu_custom_call.1} parent=1 // pred_region
      _
    $region17: #{tpu_custom_call.1} parent=1 // pred_fallthru
      _
    // Predicated region
    $region18: #{tpu_custom_call.1} parent=1 // pred_check
      _
    $region19: #{tpu_custom_call.1} parent=1 // pred_check_branch
      %45 = sbr.rel (0) target = $region21
    $region20: #{tpu_custom_call.1} parent=1 // pred_region
      _
    $region21: #{tpu_custom_call.1} parent=1 // pred_fallthru
      _
    // Predicated region
    $region22: #{tpu_custom_call.1} parent=1 // pred_check
      _
    $region23: #{tpu_custom_call.1} parent=1 // pred_check_branch
      %47 = sbr.rel (0) target = $region25
    $region24: #{tpu_custom_call.1} parent=1 // pred_region
      _
    $region25: #{tpu_custom_call.1} parent=1 // pred_fallthru
      _
    // Predicated region
    $region26: #{tpu_custom_call.1} parent=1 // pred_check
      _
    $region27: #{tpu_custom_call.1} parent=1 // pred_check_branch
      %49 = sbr.rel (0) target = $region29
    $region28: #{tpu_custom_call.1} parent=1 // pred_region
      _
    $region29: #{tpu_custom_call.1} parent=1 // pred_fallthru
      _
    // Predicated region
    $region30: #{tpu_custom_call.1} parent=1 // pred_check
      _
    $region31: #{tpu_custom_call.1} parent=1 // pred_check_branch
      %51 = sbr.rel (0) target = $region33
    $region32: #{tpu_custom_call.1} parent=1 // pred_region
      %52 = dma.done [#allocation3], 64
    $region33: #{tpu_custom_call.1} parent=1 // pred_fallthru
      _
    // Predicated region
    $region34: #{tpu_custom_call.1} parent=1 // pred_check
      _
    $region35: #{tpu_custom_call.1} parent=1 // pred_check_branch
      %54 = sbr.rel (0) target = $region37
    $region36: #{tpu_custom_call.1} parent=1 // pred_region
      %55 = dma.done [#allocation6], 512
    $region37: #{tpu_custom_call.1} parent=1 // pred_fallthru
      _
    %v57 = vld [vmem:[%s1] sm:$0xf]
    %v58 = vld [vmem:[%s1 + $0x4] sm:$0xf]
    %v59 = vld [vmem:[%s1 + $0x8] sm:$0xf]
    %v60 = vld [vmem:[%s1 + $0xc] sm:$0xf]
    %v61 = vld [vmem:[%s1 + $0x10] sm:$0xf]
    %v62 = vld [vmem:[%s1 + $0x14] sm:$0xf]
    %v63 = vld [vmem:[%s1 + $0x18] sm:$0xf]
    %v64 = vld [vmem:[%s1 + $0x1c] sm:$0xf]
    %v65 = vld [vmem:[%s3] sm:$0xf]
    %v66 = vld [vmem:[%s3 + $0x4] sm:$0xf]
    %v75 = vunpack.c.l.b16 %v57
    %v76 = vunpack.c.l.b16 %v58
    %v77 = vunpack.c.l.b16 %v59
    %v78 = vunpack.c.l.b16 %v60
    %v79 = vunpack.c.l.b16 %v61
    %v80 = vunpack.c.l.b16 %v62
    %v81 = vunpack.c.l.b16 %v63
    %v82 = vunpack.c.l.b16 %v64
    %v83 = vpack.c.b16 %v76, %v75
    %v84 = vpack.c.b16 %v78, %v77
    %v85 = vpack.c.b16 %v80, %v79
    %v86 = vpack.c.b16 %v82, %v81
    %v89 = vunpack.c.l.b16 %v65
    %v90 = vunpack.c.l.b16 %v66
    %v91 = vpack.c.b16 %v90, %v89
    %vm93 = vcmask 130048
    %v95 = vsel %vm93, %v83, 0
    %v98 = vsel %vm93, %v84, 0
    %v101 = vsel %vm93, %v85, 0
    %v104 = vsel %vm93, %v86, 0
    %106 = vmatprep.subr.bf16.mxu0 0
    %107 = vmatpush1.bf16.msra.mxu0 %v91
    %108 = vmatprep.subr.bf16.mxu0 0
    %109 = vmatpush1.bf16.msra.mxu0 0
    %110 = vmatprep.subr.bf16.mxu0 0
    %111 = vmatpush1.bf16.msra.mxu0 0
    %112 = vmatprep.subr.bf16.mxu0 0
    %113 = vmatpush1.bf16.msra.mxu0 0
    %114 = vmatprep.subr.bf16.mxu0 0
    %115 = vmatpush1.bf16.msra.mxu0 0
    %116 = vmatprep.subr.bf16.mxu0 0
    %117 = vmatpush1.bf16.msra.mxu0 0
    %118 = vmatprep.subr.bf16.mxu0 0
    %119 = vmatpush1.bf16.msra.mxu0 0
    %120 = vmatprep.subr.bf16.mxu0 0
    %121 = vmatpush1.bf16.msra.mxu0 0
    %122 = vmatprep.subr.bf16.mxu0 0
    %123 = vmatpush1.bf16.msra.mxu0 0
    %124 = vmatprep.subr.bf16.mxu0 0
    %125 = vmatpush1.bf16.msra.mxu0 0
    %126 = vmatprep.subr.bf16.mxu0 0
    %127 = vmatpush1.bf16.msra.mxu0 0
    %128 = vmatprep.subr.bf16.mxu0 0
    %129 = vmatpush1.bf16.msra.mxu0 0
    %130 = vmatprep.subr.bf16.mxu0 0
    %131 = vmatpush1.bf16.msra.mxu0 0
    %132 = vmatprep.subr.bf16.mxu0 0
    %133 = vmatpush1.bf16.msra.mxu0 0
    %134 = vmatprep.subr.bf16.mxu0 0
    %135 = vmatpush1.bf16.msra.mxu0 0
    %136 = vmatprep.subr.bf16.mxu0 0
    %137 = vmatpush1.bf16.msra.mxu0 0
    %138 = vmatprep.mubr.bf16.mxu0 0
    %139 = vmatmul.mubr.bf16.gmra.mrb[0].mxu0 %v95
    %v140 = vpop.f32.mrb[0].mxu0
    %v141 = vadd.f32 0.0, %v140
    %v142 = vpop.f32.mrb[0].mxu0
    %v143 = vpop.f32.mrb[0].mxu0
    %v144 = vadd.f32 0.0, %v143
    %v145 = vpop.f32.mrb[0].mxu0
    %146 = vmatprep.mubr.bf16.mxu0 0
    %147 = vmatmul.mubr.bf16.gmra.mrb[0].mxu0 %v98
    %v148 = vpop.f32.mrb[0].mxu0
    %v149 = vadd.f32 0.0, %v148
    %v150 = vpop.f32.mrb[0].mxu0
    %v151 = vpop.f32.mrb[0].mxu0
    %v152 = vadd.f32 0.0, %v151
    %v153 = vpop.f32.mrb[0].mxu0
    %154 = vmatprep.mubr.bf16.mxu0 0
    %155 = vmatmul.mubr.bf16.gmra.mrb[0].mxu0 %v101
    %v156 = vpop.f32.mrb[0].mxu0
    %v157 = vadd.f32 0.0, %v156
    %v158 = vpop.f32.mrb[0].mxu0
    %v159 = vpop.f32.mrb[0].mxu0
    %v160 = vadd.f32 0.0, %v159
    %v161 = vpop.f32.mrb[0].mxu0
    %162 = vmatprep.mubr.bf16.mxu0 0
    %163 = vmatmul.mubr.bf16.gmra.mrb[0].mxu0 %v104
    %v164 = vpop.f32.mrb[0].mxu0
    %v165 = vadd.f32 0.0, %v164
    %v166 = vpop.f32.mrb[0].mxu0
    %v167 = vpop.f32.mrb[0].mxu0
    %v168 = vadd.f32 0.0, %v167
    %v169 = vpop.f32.mrb[0].mxu0
    %170 = vdwg.mxu0
    %v171 = vld [vmem:[#allocation2] sm:$0xf]
    %v172 = vld [vmem:[%s4] sm:$0xf]
    %v173 = vld [vmem:[%s4 + $0x4] sm:$0xf]
    %v174 = vld [vmem:[%s5] sm:$0x1]
    %v176 = vlaneseq
    %v177 = vshrl.u32 %v176, 7
    %v178 = vsub.s32 0, %v177
    %v179 = vrot.slane %v174, %v178
    %v183 = vunpack.c.l.b16 %v172
    %v184 = vunpack.c.l.b16 %v173
    %v185 = vpack.c.b16 %v184, %v183
    %v188 = vsel %vm93, %v171, 0
    %190 = vmatprep.subr.bf16.mxu0 0
    %191 = vmatpush1.bf16.msra.mxu0 %v185
    %192 = vmatprep.subr.bf16.mxu0 0
    %193 = vmatpush1.bf16.msra.mxu0 0
    %194 = vmatprep.subr.bf16.mxu0 0
    %195 = vmatpush1.bf16.msra.mxu0 0
    %196 = vmatprep.subr.bf16.mxu0 0
    %197 = vmatpush1.bf16.msra.mxu0 0
    %198 = vmatprep.subr.bf16.mxu0 0
    %199 = vmatpush1.bf16.msra.mxu0 0
    %200 = vmatprep.subr.bf16.mxu0 0
    %201 = vmatpush1.bf16.msra.mxu0 0
    %202 = vmatprep.subr.bf16.mxu0 0
    %203 = vmatpush1.bf16.msra.mxu0 0
    %204 = vmatprep.subr.bf16.mxu0 0
    %205 = vmatpush1.bf16.msra.mxu0 0
    %206 = vmatprep.subr.bf16.mxu0 0
    %207 = vmatpush1.bf16.msra.mxu0 0
    %208 = vmatprep.subr.bf16.mxu0 0
    %209 = vmatpush1.bf16.msra.mxu0 0
    %210 = vmatprep.subr.bf16.mxu0 0
    %211 = vmatpush1.bf16.msra.mxu0 0
    %212 = vmatprep.subr.bf16.mxu0 0
    %213 = vmatpush1.bf16.msra.mxu0 0
    %214 = vmatprep.subr.bf16.mxu0 0
    %215 = vmatpush1.bf16.msra.mxu0 0
    %216 = vmatprep.subr.bf16.mxu0 0
    %217 = vmatpush1.bf16.msra.mxu0 0
    %218 = vmatprep.subr.bf16.mxu0 0
    %219 = vmatpush1.bf16.msra.mxu0 0
    %220 = vmatprep.subr.bf16.mxu0 0
    %221 = vmatpush1.bf16.msra.mxu0 0
    %222 = vmatprep.mubr.bf16.mxu0 0
    %223 = vmatmul.mubr.bf16.gmra.mrb[0].mxu0 %v188
    %v224 = vpop.f32.mrb[0].mxu0
    %v225 = vadd.f32 %v179, %v224
    %v226 = vpop.f32.mrb[0].mxu0
    %v227 = vpop.f32.mrb[0].mxu0
    %v228 = vpop.f32.mrb[0].mxu0
    %229 = vdwg.mxu0
    %v231 = vcombine.high %v225, %v225
    %v233 = vunpack.c.l.s4 1966171168
    %v234 = vunpack.c.0.s8 %v233
    %v235 = vlaneseq
    %v236 = vshrl.u32 %v235, 7
    %v237 = vsub.s32 %v234, %v236
    %v238 = vrot.slane %v225, %v237
    %v240 = vunpack.c.l.s4 1966171168
    %v241 = vunpack.c.0.s8 %v240
    %v242 = vlaneseq
    %v243 = vshrl.u32 %v242, 7
    %v244 = vsub.s32 %v241, %v243
    %v245 = vrot.slane %v231, %v244
    %v246 = vcombine.high %v238, %v238
    %v247 = vcombine.high %v245, %v245
    %v249 = vunpack.c.l.s4 1966171168
    %v250 = vunpack.c.0.s8 %v249
    %v251 = vlaneseq
    %v252 = vshrl.u32 %v251, 7
    %v253 = vsub.s32 %v250, %v252
    %v254 = vrot.slane %v238, %v253
    %v256 = vunpack.c.l.s4 1966171168
    %v257 = vunpack.c.0.s8 %v256
    %v258 = vlaneseq
    %v259 = vshrl.u32 %v258, 7
    %v260 = vsub.s32 %v257, %v259
    %v261 = vrot.slane %v245, %v260
    %v263 = vunpack.c.l.s4 1966171168
    %v264 = vunpack.c.0.s8 %v263
    %v265 = vlaneseq
    %v266 = vshrl.u32 %v265, 7
    %v267 = vsub.s32 %v264, %v266
    %v268 = vrot.slane %v246, %v267
    %v270 = vunpack.c.l.s4 1966171168
    %v271 = vunpack.c.0.s8 %v270
    %v272 = vlaneseq
    %v273 = vshrl.u32 %v272, 7
    %v274 = vsub.s32 %v271, %v273
    %v275 = vrot.slane %v247, %v274
    %v276 = vcombine.high %v254, %v254
    %v277 = vcombine.high %v261, %v261
    %v278 = vcombine.high %v268, %v268
    %v279 = vcombine.high %v275, %v275
    %v280 = vlaneseq
    %v281 = vshrl.u32 %v280, 7
    %v282 = vsub.s32 0, %v281
    %v283 = vrot.slane %v254, %v282
    %v284 = vlaneseq
    %v285 = vshrl.u32 %v284, 7
    %v286 = vsub.s32 0, %v285
    %v287 = vrot.slane %v268, %v286
    %v288 = vlaneseq
    %v289 = vshrl.u32 %v288, 7
    %v290 = vsub.s32 0, %v289
    %v291 = vrot.slane %v276, %v290
    %v292 = vlaneseq
    %v293 = vshrl.u32 %v292, 7
    %v294 = vsub.s32 0, %v293
    %v295 = vrot.slane %v278, %v294
    %v296 = vlaneseq
    %v297 = vshrl.u32 %v296, 7
    %v298 = vsub.s32 0, %v297
    %v299 = vrot.slane %v261, %v298
    %v300 = vlaneseq
    %v301 = vshrl.u32 %v300, 7
    %v302 = vsub.s32 0, %v301
    %v303 = vrot.slane %v275, %v302
    %v304 = vlaneseq
    %v305 = vshrl.u32 %v304, 7
    %v306 = vsub.s32 0, %v305
    %v307 = vrot.slane %v277, %v306
    %v308 = vlaneseq
    %v309 = vshrl.u32 %v308, 7
    %v310 = vsub.s32 0, %v309
    %v311 = vrot.slane %v279, %v310
    %v320 = vadd.f32 %v141, %v283
    %v321 = vadd.f32 %v144, %v287
    %v322 = vadd.f32 %v149, %v291
    %v323 = vadd.f32 %v152, %v295
    %v324 = vadd.f32 %v157, %v299
    %v325 = vadd.f32 %v160, %v303
    %v326 = vadd.f32 %v165, %v307
    %v327 = vadd.f32 %v168, %v311
    %v328 = vmax.f32 %v320, 0.0
    %v329 = vmax.f32 %v321, 0.0
    %v330 = vmax.f32 %v322, 0.0
    %v331 = vmax.f32 %v323, 0.0
    %v332 = vmax.f32 %v324, 0.0
    %v333 = vmax.f32 %v325, 0.0
    %v334 = vmax.f32 %v326, 0.0
    %v335 = vmax.f32 %v327, 0.0
    %v336 = vld [vmem:[%s6] sm:$0xff]
    %v337 = vld [vmem:[%s6 + $0x8] sm:$0xff]
    %v338 = vld [vmem:[%s6 + $0x10] sm:$0xff]
    %v339 = vld [vmem:[%s6 + $0x18] sm:$0xff]
    %vm340 = vcmask 261120
    %v342 = vsel %vm340, %v328, 0
    %v345 = vsel %vm340, %v329, 0
    %v348 = vsel %vm340, %v330, 0
    %v351 = vsel %vm340, %v331, 0
    %v354 = vsel %vm340, %v332, 0
    %v357 = vsel %vm340, %v333, 0
    %v360 = vsel %vm340, %v334, 0
    %v363 = vsel %vm340, %v335, 0
    %365 = vmatprep.subr.mxu0 0.0
    %366 = vmatpush1.msra.mxu0 %v336
    %367 = vmatprep.subr.mxu0 0.0
    %368 = vmatpush1.msra.mxu0 %v337
    %369 = vmatprep.subr.mxu0 0.0
    %370 = vmatpush1.msra.mxu0 %v338
    %371 = vmatprep.subr.mxu0 0.0
    %372 = vmatpush1.msra.mxu0 %v339
    %373 = vmatprep.subr.mxu0 0.0
    %374 = vmatpush1.msra.mxu0 0.0
    %375 = vmatprep.subr.mxu0 0.0
    %376 = vmatpush1.msra.mxu0 0.0
    %377 = vmatprep.subr.mxu0 0.0
    %378 = vmatpush1.msra.mxu0 0.0
    %379 = vmatprep.subr.mxu0 0.0
    %380 = vmatpush1.msra.mxu0 0.0
    %381 = vmatprep.subr.mxu0 0.0
    %382 = vmatpush1.msra.mxu0 0.0
    %383 = vmatprep.subr.mxu0 0.0
    %384 = vmatpush1.msra.mxu0 0.0
    %385 = vmatprep.subr.mxu0 0.0
    %386 = vmatpush1.msra.mxu0 0.0
    %387 = vmatprep.subr.mxu0 0.0
    %388 = vmatpush1.msra.mxu0 0.0
    %389 = vmatprep.subr.mxu0 0.0
    %390 = vmatpush1.msra.mxu0 0.0
    %391 = vmatprep.subr.mxu0 0.0
    %392 = vmatpush1.msra.mxu0 0.0
    %393 = vmatprep.subr.mxu0 0.0
    %394 = vmatpush1.msra.mxu0 0.0
    %395 = vmatprep.subr.mxu0 0.0
    %396 = vmatpush1.msra.mxu0 0.0
    %397 = vmatprep.subr.mxu0 0.0
    %398 = vmatpush1.msra.mxu0 0.0
    %399 = vmatprep.subr.mxu0 0.0
    %400 = vmatpush1.msra.mxu0 0.0
    %401 = vmatprep.subr.mxu0 0.0
    %402 = vmatpush1.msra.mxu0 0.0
    %403 = vmatprep.subr.mxu0 0.0
    %404 = vmatpush1.msra.mxu0 0.0
    %405 = vmatprep.subr.mxu0 0.0
    %406 = vmatpush1.msra.mxu0 0.0
    %407 = vmatprep.subr.mxu0 0.0
    %408 = vmatpush1.msra.mxu0 0.0
    %409 = vmatprep.subr.mxu0 0.0
    %410 = vmatpush1.msra.mxu0 0.0
    %411 = vmatprep.subr.mxu0 0.0
    %412 = vmatpush1.msra.mxu0 0.0
    %413 = vmatprep.subr.mxu0 0.0
    %414 = vmatpush1.msra.mxu0 0.0
    %415 = vmatprep.subr.mxu0 0.0
    %416 = vmatpush1.msra.mxu0 0.0
    %417 = vmatprep.subr.mxu0 0.0
    %418 = vmatpush1.msra.mxu0 0.0
    %419 = vmatprep.subr.mxu0 0.0
    %420 = vmatpush1.msra.mxu0 0.0
    %421 = vmatprep.subr.mxu0 0.0
    %422 = vmatpush1.msra.mxu0 0.0
    %423 = vmatprep.subr.mxu0 0.0
    %424 = vmatpush1.msra.mxu0 0.0
    %425 = vmatprep.subr.mxu0 0.0
    %426 = vmatpush1.msra.mxu0 0.0
    %427 = vmatprep.subr.mxu0 0.0
    %428 = vmatpush1.msra.mxu0 0.0
    %429 = vmatprep.mubr.f32.mxu0 0.0
    %430 = vmatmul.mubr.f32.gmra.mrb[0].mxu0 %v342
    %v431 = vpop.f32.mrb[0].mxu0
    %v432 = vadd.f32 0.0, %v431
    %v433 = vpop.f32.mrb[0].mxu0
    %434 = vmatprep.mubr.f32.mxu0 0.0
    %435 = vmatmul.mubr.f32.gmra.mrb[0].mxu0 %v345
    %v436 = vpop.f32.mrb[0].mxu0
    %v437 = vadd.f32 0.0, %v436
    %v438 = vpop.f32.mrb[0].mxu0
    %439 = vmatprep.mubr.f32.mxu0 0.0
    %440 = vmatmul.mubr.f32.gmra.mrb[0].mxu0 %v348
    %v441 = vpop.f32.mrb[0].mxu0
    %v442 = vadd.f32 0.0, %v441
    %v443 = vpop.f32.mrb[0].mxu0
    %444 = vmatprep.mubr.f32.mxu0 0.0
    %445 = vmatmul.mubr.f32.gmra.mrb[0].mxu0 %v351
    %v446 = vpop.f32.mrb[0].mxu0
    %v447 = vadd.f32 0.0, %v446
    %v448 = vpop.f32.mrb[0].mxu0
    %449 = vmatprep.mubr.f32.mxu0 0.0
    %450 = vmatmul.mubr.f32.gmra.mrb[0].mxu0 %v354
    %v451 = vpop.f32.mrb[0].mxu0
    %v452 = vadd.f32 0.0, %v451
    %v453 = vpop.f32.mrb[0].mxu0
    %454 = vmatprep.mubr.f32.mxu0 0.0
    %455 = vmatmul.mubr.f32.gmra.mrb[0].mxu0 %v357
    %v456 = vpop.f32.mrb[0].mxu0
    %v457 = vadd.f32 0.0, %v456
    %v458 = vpop.f32.mrb[0].mxu0
    %459 = vmatprep.mubr.f32.mxu0 0.0
    %460 = vmatmul.mubr.f32.gmra.mrb[0].mxu0 %v360
    %v461 = vpop.f32.mrb[0].mxu0
    %v462 = vadd.f32 0.0, %v461
    %v463 = vpop.f32.mrb[0].mxu0
    %464 = vmatprep.mubr.f32.mxu0 0.0
    %465 = vmatmul.mubr.f32.gmra.mrb[0].mxu0 %v363
    %v466 = vpop.f32.mrb[0].mxu0
    %v467 = vadd.f32 0.0, %v466
    %v468 = vpop.f32.mrb[0].mxu0
    %469 = vdwg.mxu0
    %vm470 = vcmask 7168
    %v471 = vsel %vm470, %v432, -inf
    %v472 = vrot.slane %v471, 4
    %v473 = vmax.f32 %v471, %v472
    %v474 = vrot.slane %v473, 2
    %v475 = vmax.f32 %v473, %v474
    %v476 = vrot.slane %v475, 1
    %v477 = vmax.f32 %v475, %v476
    %v478 = vsel %vm470, %v437, -inf
    %v479 = vrot.slane %v478, 4
    %v480 = vmax.f32 %v478, %v479
    %v481 = vrot.slane %v480, 2
    %v482 = vmax.f32 %v480, %v481
    %v483 = vrot.slane %v482, 1
    %v484 = vmax.f32 %v482, %v483
    %v485 = vsel %vm470, %v442, -inf
    %v486 = vrot.slane %v485, 4
    %v487 = vmax.f32 %v485, %v486
    %v488 = vrot.slane %v487, 2
    %v489 = vmax.f32 %v487, %v488
    %v490 = vrot.slane %v489, 1
    %v491 = vmax.f32 %v489, %v490
    %v492 = vsel %vm470, %v447, -inf
    %v493 = vrot.slane %v492, 4
    %v494 = vmax.f32 %v492, %v493
    %v495 = vrot.slane %v494, 2
    %v496 = vmax.f32 %v494, %v495
    %v497 = vrot.slane %v496, 1
    %v498 = vmax.f32 %v496, %v497
    %v499 = vsel %vm470, %v452, -inf
    %v500 = vrot.slane %v499, 4
    %v501 = vmax.f32 %v499, %v500
    %v502 = vrot.slane %v501, 2
    %v503 = vmax.f32 %v501, %v502
    %v504 = vrot.slane %v503, 1
    %v505 = vmax.f32 %v503, %v504
    %v506 = vsel %vm470, %v457, -inf
    %v507 = vrot.slane %v506, 4
    %v508 = vmax.f32 %v506, %v507
    %v509 = vrot.slane %v508, 2
    %v510 = vmax.f32 %v508, %v509
    %v511 = vrot.slane %v510, 1
    %v512 = vmax.f32 %v510, %v511
    %v513 = vsel %vm470, %v462, -inf
    %v514 = vrot.slane %v513, 4
    %v515 = vmax.f32 %v513, %v514
    %v516 = vrot.slane %v515, 2
    %v517 = vmax.f32 %v515, %v516
    %v518 = vrot.slane %v517, 1
    %v519 = vmax.f32 %v517, %v518
    %v520 = vsel %vm470, %v467, -inf
    %v521 = vrot.slane %v520, 4
    %v522 = vmax.f32 %v520, %v521
    %v523 = vrot.slane %v522, 2
    %v524 = vmax.f32 %v522, %v523
    %v525 = vrot.slane %v524, 1
    %v526 = vmax.f32 %v524, %v525
    %v527 = vsub.f32 %v432, %v477
    %v528 = vsub.f32 %v437, %v484
    %v529 = vsub.f32 %v442, %v491
    %v530 = vsub.f32 %v447, %v498
    %v531 = vsub.f32 %v452, %v505
    %v532 = vsub.f32 %v457, %v512
    %v533 = vsub.f32 %v462, %v519
    %v534 = vsub.f32 %v467, %v526
    %v535 = vmul.f32 %v527, 1.442695
    %v536 = vpow.pop %v535
    %v537 = vmul.f32 %v528, 1.442695
    %v538 = vpow.pop %v537
    %v539 = vmul.f32 %v529, 1.442695
    %v540 = vpow.pop %v539
    %v541 = vmul.f32 %v530, 1.442695
    %v542 = vpow.pop %v541
    %v543 = vmul.f32 %v531, 1.442695
    %v544 = vpow.pop %v543
    %v545 = vmul.f32 %v532, 1.442695
    %v546 = vpow.pop %v545
    %v547 = vmul.f32 %v533, 1.442695
    %v548 = vpow.pop %v547
    %v549 = vmul.f32 %v534, 1.442695
    %v550 = vpow.pop %v549
    %v551 = vsel %vm470, %v536, 0.0
    %v552 = vrot.slane %v551, 4
    %v553 = vadd.f32 %v551, %v552
    %v554 = vrot.slane %v553, 2
    %v555 = vadd.f32 %v553, %v554
    %v556 = vrot.slane %v555, 1
    %v557 = vadd.f32 %v555, %v556
    %v558 = vsel %vm470, %v538, 0.0
    %v559 = vrot.slane %v558, 4
    %v560 = vadd.f32 %v558, %v559
    %v561 = vrot.slane %v560, 2
    %v562 = vadd.f32 %v560, %v561
    %v563 = vrot.slane %v562, 1
    %v564 = vadd.f32 %v562, %v563
    %v565 = vsel %vm470, %v540, 0.0
    %v566 = vrot.slane %v565, 4
    %v567 = vadd.f32 %v565, %v566
    %v568 = vrot.slane %v567, 2
    %v569 = vadd.f32 %v567, %v568
    %v570 = vrot.slane %v569, 1
    %v571 = vadd.f32 %v569, %v570
    %v572 = vsel %vm470, %v542, 0.0
    %v573 = vrot.slane %v572, 4
    %v574 = vadd.f32 %v572, %v573
    %v575 = vrot.slane %v574, 2
    %v576 = vadd.f32 %v574, %v575
    %v577 = vrot.slane %v576, 1
    %v578 = vadd.f32 %v576, %v577
    %v579 = vsel %vm470, %v544, 0.0
    %v580 = vrot.slane %v579, 4
    %v581 = vadd.f32 %v579, %v580
    %v582 = vrot.slane %v581, 2
    %v583 = vadd.f32 %v581, %v582
    %v584 = vrot.slane %v583, 1
    %v585 = vadd.f32 %v583, %v584
    %v586 = vsel %vm470, %v546, 0.0
    %v587 = vrot.slane %v586, 4
    %v588 = vadd.f32 %v586, %v587
    %v589 = vrot.slane %v588, 2
    %v590 = vadd.f32 %v588, %v589
    %v591 = vrot.slane %v590, 1
    %v592 = vadd.f32 %v590, %v591
    %v593 = vsel %vm470, %v548, 0.0
    %v594 = vrot.slane %v593, 4
    %v595 = vadd.f32 %v593, %v594
    %v596 = vrot.slane %v595, 2
    %v597 = vadd.f32 %v595, %v596
    %v598 = vrot.slane %v597, 1
    %v599 = vadd.f32 %v597, %v598
    %v600 = vsel %vm470, %v550, 0.0
    %v601 = vrot.slane %v600, 4
    %v602 = vadd.f32 %v600, %v601
    %v603 = vrot.slane %v602, 2
    %v604 = vadd.f32 %v602, %v603
    %v605 = vrot.slane %v604, 1
    %v606 = vadd.f32 %v604, %v605
    %v607 = vrcp.pop %v557
    %v608 = vrcp.pop %v564
    %v609 = vrcp.pop %v571
    %v610 = vrcp.pop %v578
    %v611 = vrcp.pop %v585
    %v612 = vrcp.pop %v592
    %v613 = vrcp.pop %v599
    %v614 = vrcp.pop %v606
    %v615 = vmul.f32 %v536, %v607
    %v616 = vmul.f32 %v538, %v608
    %v617 = vmul.f32 %v540, %v609
    %v618 = vmul.f32 %v542, %v610
    %v619 = vmul.f32 %v544, %v611
    %v620 = vmul.f32 %v546, %v612
    %v621 = vmul.f32 %v548, %v613
    %v622 = vmul.f32 %v550, %v614
    %v623 = vadd.f32 %v615, 0.0
    %v624 = vadd.f32 %v616, 0.0
    %v625 = vadd.f32 %v617, 0.0
    %v626 = vadd.f32 %v618, 0.0
    %v627 = vadd.f32 %v619, 0.0
    %v628 = vadd.f32 %v620, 0.0
    %v629 = vadd.f32 %v621, 0.0
    %v630 = vadd.f32 %v622, 0.0
    %639 = vset.pattern.permute.xlu0 0
    %640 = vperm.xlu0 %639, %v623
    %v641 = vpop.permute.xlu0 %640
    %642 = vset.pattern.permute.xlu0 0
    %643 = vperm.xlu0 %642, %v624
    %v644 = vpop.permute.xlu0 %643
    %645 = vset.pattern.permute.xlu0 0
    %646 = vperm.xlu0 %645, %v625
    %v647 = vpop.permute.xlu0 %646
    %648 = vset.pattern.permute.xlu0 0
    %649 = vperm.xlu0 %648, %v626
    %v650 = vpop.permute.xlu0 %649
    %651 = vset.pattern.permute.xlu0 0
    %652 = vperm.xlu0 %651, %v627
    %v653 = vpop.permute.xlu0 %652
    %654 = vset.pattern.permute.xlu0 0
    %655 = vperm.xlu0 %654, %v628
    %v656 = vpop.permute.xlu0 %655
    %657 = vset.pattern.permute.xlu0 0
    %658 = vperm.xlu0 %657, %v629
    %v659 = vpop.permute.xlu0 %658
    %660 = vset.pattern.permute.xlu0 0
    %661 = vperm.xlu0 %660, %v630
    %v662 = vpop.permute.xlu0 %661
    %v663 = vlaneseq
    %v664 = vand.u32 %v663, 127
    %v665 = vlaneseq
    %v666 = vshrl.u32 %v665, 7
    %v667 = vsub.s32 %v664, %v666
    %v668 = vrot.slane %v641, %v667
    %v669 = vlaneseq
    %v670 = vshrl.u32 %v669, 7
    %v671 = vsub.s32 %v664, %v670
    %v672 = vrot.slane %v644, %v671
    %v673 = vlaneseq
    %v674 = vshrl.u32 %v673, 7
    %v675 = vsub.s32 %v664, %v674
    %v676 = vrot.slane %v647, %v675
    %v677 = vlaneseq
    %v678 = vshrl.u32 %v677, 7
    %v679 = vsub.s32 %v664, %v678
    %v680 = vrot.slane %v650, %v679
    %v681 = vlaneseq
    %v682 = vshrl.u32 %v681, 7
    %v683 = vsub.s32 %v664, %v682
    %v684 = vrot.slane %v653, %v683
    %v685 = vlaneseq
    %v686 = vshrl.u32 %v685, 7
    %v687 = vsub.s32 %v664, %v686
    %v688 = vrot.slane %v656, %v687
    %v689 = vlaneseq
    %v690 = vshrl.u32 %v689, 7
    %v691 = vsub.s32 %v664, %v690
    %v692 = vrot.slane %v659, %v691
    %v693 = vlaneseq
    %v694 = vshrl.u32 %v693, 7
    %v695 = vsub.s32 %v664, %v694
    %v696 = vrot.slane %v662, %v695
    %vm697 = vcmask 1041409
    %v698 = vsel %vm697, %v672, %v668
    %vm699 = vcmask 1042434
    %v700 = vsel %vm699, %v676, %v698
    %vm701 = vcmask 1043459
    %v702 = vsel %vm701, %v680, %v700
    %vm703 = vcmask 1044484
    %v704 = vsel %vm703, %v684, %v702
    %vm705 = vcmask 1045509
    %v706 = vsel %vm705, %v688, %v704
    %vm707 = vcmask 1046534
    %v708 = vsel %vm707, %v692, %v706
    %vm709 = vcmask 1047559
    %v710 = vsel %vm709, %v696, %v708
    %vm712 = vcmask 64512
    %713 = vst.msk [vmem:[#allocation8] sm:$0xff] %vm712, %v710
    %v714 = vld [vmem:[#allocation5] sm:$0xf]
    %v715 = vld [vmem:[#allocation5 + $0x4] sm:$0xf]
    %v716 = vld [vmem:[#allocation5 + $0x8] sm:$0xf]
    %v717 = vld [vmem:[#allocation5 + $0xc] sm:$0xf]
    %v718 = vld [vmem:[#allocation5 + $0x10] sm:$0xf]
    %v719 = vld [vmem:[#allocation5 + $0x14] sm:$0xf]
    %v720 = vld [vmem:[#allocation5 + $0x18] sm:$0xf]
    %v721 = vld [vmem:[#allocation5 + $0x1c] sm:$0xf]
    %v722 = vunpack.c.l.bf16 %v714
    %v723 = vunpack.c.l.bf16 %v715
    %v724 = vunpack.c.l.bf16 %v716
    %v725 = vunpack.c.l.bf16 %v717
    %v726 = vunpack.c.l.bf16 %v718
    %v727 = vunpack.c.l.bf16 %v719
    %v728 = vunpack.c.l.bf16 %v720
    %v729 = vunpack.c.l.bf16 %v721
    %731 = vset.pattern.permute.xlu0 0
    %732 = vperm.xlu0 %731, %v615
    %v733 = vpop.permute.xlu0 %732
    %736 = vset.pattern.permute.xlu0 0
    %737 = vperm.xlu0 %736, %v616
    %v738 = vpop.permute.xlu0 %737
    %741 = vset.pattern.permute.xlu0 0
    %742 = vperm.xlu0 %741, %v617
    %v743 = vpop.permute.xlu0 %742
    %746 = vset.pattern.permute.xlu0 0
    %747 = vperm.xlu0 %746, %v618
    %v748 = vpop.permute.xlu0 %747
    %751 = vset.pattern.permute.xlu0 0
    %752 = vperm.xlu0 %751, %v619
    %v753 = vpop.permute.xlu0 %752
    %756 = vset.pattern.permute.xlu0 0
    %757 = vperm.xlu0 %756, %v620
    %v758 = vpop.permute.xlu0 %757
    %761 = vset.pattern.permute.xlu0 0
    %762 = vperm.xlu0 %761, %v621
    %v763 = vpop.permute.xlu0 %762
    %766 = vset.pattern.permute.xlu0 0
    %767 = vperm.xlu0 %766, %v622
    %v768 = vpop.permute.xlu0 %767
    %v770 = vmul.f32 %v733, %v722
    %v771 = vmul.f32 %v738, %v723
    %v772 = vmul.f32 %v743, %v724
    %v773 = vmul.f32 %v748, %v725
    %v774 = vmul.f32 %v753, %v726
    %v775 = vmul.f32 %v758, %v727
    %v776 = vmul.f32 %v763, %v728
    %v777 = vmul.f32 %v768, %v729
    %v778 = vsel %vm93, %v770, 0.0
    %v779 = vrot.slane %v778, 4
    %v780 = vadd.f32 %v778, %v779
    %v781 = vrot.slane %v780, 2
    %v782 = vadd.f32 %v780, %v781
    %v783 = vrot.slane %v782, 1
    %v784 = vadd.f32 %v782, %v783
    %v785 = vsel %vm93, %v771, 0.0
    %v786 = vrot.slane %v785, 4
    %v787 = vadd.f32 %v785, %v786
    %v788 = vrot.slane %v787, 2
    %v789 = vadd.f32 %v787, %v788
    %v790 = vrot.slane %v789, 1
    %v791 = vadd.f32 %v789, %v790
    %v792 = vsel %vm93, %v772, 0.0
    %v793 = vrot.slane %v792, 4
    %v794 = vadd.f32 %v792, %v793
    %v795 = vrot.slane %v794, 2
    %v796 = vadd.f32 %v794, %v795
    %v797 = vrot.slane %v796, 1
    %v798 = vadd.f32 %v796, %v797
    %v799 = vsel %vm93, %v773, 0.0
    %v800 = vrot.slane %v799, 4
    %v801 = vadd.f32 %v799, %v800
    %v802 = vrot.slane %v801, 2
    %v803 = vadd.f32 %v801, %v802
    %v804 = vrot.slane %v803, 1
    %v805 = vadd.f32 %v803, %v804
    %v806 = vsel %vm93, %v774, 0.0
    %v807 = vrot.slane %v806, 4
    %v808 = vadd.f32 %v806, %v807
    %v809 = vrot.slane %v808, 2
    %v810 = vadd.f32 %v808, %v809
    %v811 = vrot.slane %v810, 1
    %v812 = vadd.f32 %v810, %v811
    %v813 = vsel %vm93, %v775, 0.0
    %v814 = vrot.slane %v813, 4
    %v815 = vadd.f32 %v813, %v814
    %v816 = vrot.slane %v815, 2
    %v817 = vadd.f32 %v815, %v816
    %v818 = vrot.slane %v817, 1
    %v819 = vadd.f32 %v817, %v818
    %v820 = vsel %vm93, %v776, 0.0
    %v821 = vrot.slane %v820, 4
    %v822 = vadd.f32 %v820, %v821
    %v823 = vrot.slane %v822, 2
    %v824 = vadd.f32 %v822, %v823
    %v825 = vrot.slane %v824, 1
    %v826 = vadd.f32 %v824, %v825
    %v827 = vsel %vm93, %v777, 0.0
    %v828 = vrot.slane %v827, 4
    %v829 = vadd.f32 %v827, %v828
    %v830 = vrot.slane %v829, 2
    %v831 = vadd.f32 %v829, %v830
    %v832 = vrot.slane %v831, 1
    %v833 = vadd.f32 %v831, %v832
    %v842 = vsel %vm697, %v791, %v784
    %v843 = vsel %vm699, %v798, %v842
    %v844 = vsel %vm701, %v805, %v843
    %v845 = vsel %vm703, %v812, %v844
    %v846 = vsel %vm705, %v819, %v845
    %v847 = vsel %vm707, %v826, %v846
    %v848 = vsel %vm709, %v833, %v847
    %850 = vst.msk [vmem:[#allocation7] sm:$0xff] %vm93, %v848
    // Predicated region
    $region38: #{tpu_custom_call.1} parent=1 // pred_check
      _
    $region39: #{tpu_custom_call.1} parent=1 // pred_check_branch
      %852 = sbr.rel (0) target = $region41
    $region40: #{tpu_custom_call.1} parent=1 // pred_region
      %s854 = ssub.s32 128, 128
      %855 = vsyncadd [#allocation4], %s854
      %s857 = sshll.u32 [#allocation7], 4
      %s858 = int_to_ptr.vmem [resolvable:$true] %s857
      %860 = dma.vmem_to_hbm [thread:$0]  %s858, 128, %s7, [#allocation4]
    $region41: #{tpu_custom_call.1} parent=1 // pred_fallthru
      _
    // Predicated region
    $region42: #{tpu_custom_call.1} parent=1 // pred_check
      _
    $region43: #{tpu_custom_call.1} parent=1 // pred_check_branch
      %862 = sbr.rel (0) target = $region45
    $region44: #{tpu_custom_call.1} parent=1 // pred_region
      %s864 = ssub.s32 128, 128
      %865 = vsyncadd [#allocation9], %s864
      %s867 = sshll.u32 [#allocation8], 4
      %s868 = int_to_ptr.vmem [resolvable:$true] %s867
      %870 = dma.vmem_to_hbm [thread:$0]  %s868, 128, %s8, [#allocation9]
    $region45: #{tpu_custom_call.1} parent=1 // pred_fallthru
      _
    // Predicated region
    $region46: #{tpu_custom_call.1} parent=1 // pred_check
      _
    $region47: #{tpu_custom_call.1} parent=1 // pred_check_branch
      %872 = sbr.rel (0) target = $region49
    $region48: #{tpu_custom_call.1} parent=1 // pred_region
      %873 = dma.done [#allocation4], 128
    $region49: #{tpu_custom_call.1} parent=1 // pred_fallthru
      _
    // Predicated region
    $region50: #{tpu_custom_call.1} parent=1 // pred_check
      _
    $region51: #{tpu_custom_call.1} parent=1 // pred_check_branch
      %875 = sbr.rel (0) target = $region53
    $region52: #{tpu_custom_call.1} parent=1 // pred_region
      %876 = dma.done [#allocation9], 128
    $region53: #{tpu_custom_call.1} parent=1 // pred_fallthru
      _
    %877 = vsyncpa [#allocation3], 1
    %878 = vsyncpa [#allocation6], 1
    %879 = vsyncpa [#allocation4], 1
    %880 = vsyncpa [#allocation9], 1

</llo_original>
